<compile_context>
chip_gen: v5e
topology: v5e:2x2
jax: 0.10.0
libtpu: 0.0.40
codegen_flags: <defaults>
</compile_context>

<pallas_src>
import functools

import jax
import jax.numpy as jnp
from jax import lax
from jax.experimental import pallas as pl
from jax.experimental.pallas import tpu as pltpu

DIM = 32
HEADS = 4
DIM_HEAD = 16
INNER = HEADS * DIM_HEAD          # 64
EPS = 1e-5                        # nn.LayerNorm default eps
SCALE = DIM_HEAD ** -0.5


def _attention_kernel(x_ref, gamma_ref, beta_ref, wqkv_ref, wout_ref, bout_ref,
                      o_ref, *, batch, seq):
    # x_ref:    (batch*seq, DIM)             flattened tokens
    # wqkv_ref: (3, HEADS, DIM, DIM_HEAD)    leading-axis (qkv, head) weight views
    # wout_ref: (HEADS, DIM_HEAD, DIM)
    f32 = jnp.float32
    x = x_ref[...].astype(f32)                       # (B*N, D)
    gamma = gamma_ref[...].astype(f32)               # (1, D)
    beta = beta_ref[...].astype(f32)                 # (1, D)
    bout = bout_ref[...].astype(f32)                 # (1, D)

    # ---- LayerNorm over last dim (biased variance, eps=1e-5); one pass over x ----
    mean = jnp.mean(x, axis=-1, keepdims=True)
    var = jnp.mean(x * x, axis=-1, keepdims=True) - mean * mean
    x_ln = (x - mean) * lax.rsqrt(var + EPS) * gamma + beta      # (B*N, D)

    # Per-batch f32 accumulators, initialized with the output-projection bias.
    accs = [jnp.broadcast_to(bout, (seq, DIM)) for _ in range(batch)]

    # ---- per-head attention; output projection folded into the head loop ----
    for h in range(HEADS):
        wq = wqkv_ref[0, h].astype(f32)              # (D, dh)  free leading-axis view
        wk = wqkv_ref[1, h].astype(f32)
        wv = wqkv_ref[2, h].astype(f32)
        wo = wout_ref[h].astype(f32)                 # (dh, D)

        # Project all B*N tokens at once for this head.
        q_all = jnp.dot(x_ln, wq, preferred_element_type=f32)    # (B*N, dh)
        k_all = jnp.dot(x_ln, wk, preferred_element_type=f32)
        v_all = jnp.dot(x_ln, wv, preferred_element_type=f32)

        for b in range(batch):
            lo = b * seq
            q = q_all[lo:lo + seq]                   # (N, dh) sublane-aligned slice
            k = k_all[lo:lo + seq]
            v = v_all[lo:lo + seq]

            # scores: q @ k^T (contract last dims, no materialized transpose)
            dots = lax.dot_general(q, k, (((1,), (1,)), ((), ())),
                                   preferred_element_type=f32) * SCALE   # (N, N)
            dots = dots - jnp.max(dots, axis=-1, keepdims=True)
            p = jnp.exp(dots)
            denom = jnp.sum(p, axis=-1, keepdims=True)
            # Defer normalization to the (N, dh) result; reciprocal runs on the EUP.
            o_h = jnp.dot(p, v, preferred_element_type=f32) * pl.reciprocal(denom, approx=True)
            # TODO(synk): nn.Dropout(p=0.0) is identity at inference; omitted.

            # Fold the output projection per head and accumulate (no head concat).
            accs[b] = accs[b] + jnp.dot(o_h, wo, preferred_element_type=f32)

    # Store each batch's rows (N=8 rows == one f32 sublane group).
    for b in range(batch):
        o_ref[b * seq:(b + 1) * seq, :] = accs[b].astype(o_ref.dtype)


def attention_forward(x, gamma, beta, w_qkv, w_out, b_out):
    B, N, D = x.shape
    assert D == DIM
    # Layout plumbing in the wrapper (reshape/transpose only, no compute hoisting).
    x_flat = x.reshape(B * N, D)
    # (D, 3*INNER) columns ordered [q|k|v], head-major inside each -> (3, H, D, dh)
    w_qkv_r = w_qkv.reshape(D, 3, HEADS, DIM_HEAD).transpose(1, 2, 0, 3)
    w_out_r = w_out.reshape(HEADS, DIM_HEAD, DIM)                 # (H, dh, D)
    gamma2 = gamma.reshape(1, D)
    beta2 = beta.reshape(1, D)
    bout2 = b_out.reshape(1, D)

    kernel = functools.partial(_attention_kernel, batch=B, seq=N)
    out_flat = pl.pallas_call(
        kernel,
        out_shape=jax.ShapeDtypeStruct((B * N, D), x.dtype),
        grid_spec=pltpu.PrefetchScalarGridSpec(
            num_scalar_prefetch=0,
            grid=(1,),   # single step: amortize fixed pipeline overhead
            in_specs=[
                pl.BlockSpec((B * N, D), lambda i: (0, 0)),                     # x (flattened)
                pl.BlockSpec((1, D), lambda i: (0, 0)),                         # LN gamma
                pl.BlockSpec((1, D), lambda i: (0, 0)),                         # LN beta
                pl.BlockSpec((3, HEADS, D, DIM_HEAD), lambda i: (0, 0, 0, 0)),  # W_qkv (head-major)
                pl.BlockSpec((HEADS, DIM_HEAD, D), lambda i: (0, 0, 0)),        # W_out (head-major)
                pl.BlockSpec((1, D), lambda i: (0, 0)),                         # b_out
            ],
            out_specs=pl.BlockSpec((B * N, D), lambda i: (0, 0)),
        ),
        compiler_params=pltpu.CompilerParams(
            dimension_semantics=("arbitrary",)),
    )(x_flat, gamma2, beta2, w_qkv_r, w_out_r, bout2)
    return out_flat.reshape(B, N, D)


def reference_forward(x, gamma, beta, w_qkv, w_out, b_out):
    # Pure-JAX reference replicating the PyTorch forward.
    mean = jnp.mean(x, axis=-1, keepdims=True)
    var = jnp.mean((x - mean) ** 2, axis=-1, keepdims=True)
    x_ln = (x - mean) / jnp.sqrt(var + EPS) * gamma + beta
    qkv = x_ln @ w_qkv                                            # (B, N, 3*INNER)
    q, k, v = jnp.split(qkv, 3, axis=-1)

    def split_heads(t):  # (B, N, H*dh) -> (B, H, N, dh)
        Bq, Nq, _ = t.shape
        return t.reshape(Bq, Nq, HEADS, DIM_HEAD).transpose(0, 2, 1, 3)

    q, k, v = map(split_heads, (q, k, v))
    dots = jnp.einsum("bhnd,bhmd->bhnm", q, k) * SCALE
    attn = jax.nn.softmax(dots, axis=-1)
    out = jnp.einsum("bhnm,bhmd->bhnd", attn, v)
    Bq, H, Nq, dh = out.shape
    out = out.transpose(0, 2, 1, 3).reshape(Bq, Nq, H * dh)
    return out @ w_out + b_out


if __name__ == "__main__":
    key = jax.random.PRNGKey(0)
    k_x, k_g, k_b, k_qkv, k_wo, k_bo = jax.random.split(key, 6)

    B, N = 2, 8
    x = jax.random.normal(k_x, (B, N, DIM), dtype=jnp.float32)

    # Deterministic parameter init (shapes follow the PyTorch module).
    gamma = jnp.ones((DIM,), jnp.float32) + 0.1 * jax.random.normal(k_g, (DIM,), jnp.float32)
    beta = 0.1 * jax.random.normal(k_b, (DIM,), jnp.float32)
    # nn.Linear weight is (out, in); stored transposed for right-multiplication.
    w_qkv = 0.1 * jax.random.normal(k_qkv, (DIM, 3 * INNER), jnp.float32)
    w_out = 0.1 * jax.random.normal(k_wo, (INNER, DIM), jnp.float32)
    b_out = 0.1 * jax.random.normal(k_bo, (DIM,), jnp.float32)

    y = attention_forward(x, gamma, beta, w_qkv, w_out, b_out)
    y = jax.block_until_ready(y)

    y_ref = reference_forward(x, gamma, beta, w_qkv, w_out, b_out)
    assert y.shape == (B, N, DIM)
    # Tolerance slightly loosened vs exact math because the softmax denominator uses
    # the EUP approximate reciprocal (pl.reciprocal(approx=True)).
    assert jnp.allclose(y, y_ref, atol=2e-3, rtol=2e-3), "mismatch vs reference"
    print("KERNEL_OK")
</pallas_src>

<mosaic_0001>
module attributes {stable_mosaic.version = 11 : i64} {
  func.func @_attention_kernel(%arg0: i32, %arg1: memref<16x32xf32, #tpu.memory_space<vmem>>, %arg2: memref<1x32xf32, #tpu.memory_space<vmem>>, %arg3: memref<1x32xf32, #tpu.memory_space<vmem>>, %arg4: memref<3x4x32x16xf32, #tpu.memory_space<vmem>>, %arg5: memref<4x16x32xf32, #tpu.memory_space<vmem>>, %arg6: memref<1x32xf32, #tpu.memory_space<vmem>>, %arg7: memref<16x32xf32, #tpu.memory_space<vmem>>) attributes {dimension_semantics = [#tpu.dimension_semantics<arbitrary>], iteration_bounds = array<i64: 1>, scalar_prefetch = 0 : i64, scratch_operands = 0 : i64, tpu.core_type = #tpu.core_type<tc>, window_params = [{pipeline_mode = #tpu.pipeline_mode<synchronous>, transform_indices = @transform_0, window_bounds = array<i64: 16, 32>}, {pipeline_mode = #tpu.pipeline_mode<synchronous>, transform_indices = @transform_1, window_bounds = array<i64: 1, 32>}, {pipeline_mode = #tpu.pipeline_mode<synchronous>, transform_indices = @transform_2, window_bounds = array<i64: 1, 32>}, {pipeline_mode = #tpu.pipeline_mode<synchronous>, transform_indices = @transform_3, window_bounds = array<i64: 3, 4, 32, 16>}, {pipeline_mode = #tpu.pipeline_mode<synchronous>, transform_indices = @transform_4, window_bounds = array<i64: 4, 16, 32>}, {pipeline_mode = #tpu.pipeline_mode<synchronous>, transform_indices = @transform_5, window_bounds = array<i64: 1, 32>}, {pipeline_mode = #tpu.pipeline_mode<synchronous>, transform_indices = @transform_6, window_bounds = array<i64: 16, 32>}]} {
    %c0 = arith.constant 0 : index
    %c0_0 = arith.constant 0 : index
    %0 = vector.load %arg1[%c0, %c0_0] : memref<16x32xf32, #tpu.memory_space<vmem>>, vector<16x32xf32>
    %c0_1 = arith.constant 0 : index
    %c0_2 = arith.constant 0 : index
    %1 = vector.load %arg2[%c0_1, %c0_2] : memref<1x32xf32, #tpu.memory_space<vmem>>, vector<1x32xf32>
    %c0_3 = arith.constant 0 : index
    %c0_4 = arith.constant 0 : index
    %2 = vector.load %arg3[%c0_3, %c0_4] : memref<1x32xf32, #tpu.memory_space<vmem>>, vector<1x32xf32>
    %c0_5 = arith.constant 0 : index
    %c0_6 = arith.constant 0 : index
    %3 = vector.load %arg6[%c0_5, %c0_6] : memref<1x32xf32, #tpu.memory_space<vmem>>, vector<1x32xf32>
    %cst = arith.constant dense<0.000000e+00> : vector<16xf32>
    %4 = vector.multi_reduction <add>, %0, %cst [1] : vector<16x32xf32> to vector<16xf32>
    %5 = vector.shape_cast %4 : vector<16xf32> to vector<16x1xf32>
    %cst_7 = arith.constant 3.200000e+01 : f32
    %6 = vector.broadcast %cst_7 : f32 to vector<16x1xf32>
    %7 = arith.divf %5, %6 : vector<16x1xf32>
    %8 = arith.mulf %0, %0 : vector<16x32xf32>
    %cst_8 = arith.constant dense<0.000000e+00> : vector<16xf32>
    %9 = vector.multi_reduction <add>, %8, %cst_8 [1] : vector<16x32xf32> to vector<16xf32>
    %10 = vector.shape_cast %9 : vector<16xf32> to vector<16x1xf32>
    %cst_9 = arith.constant 3.200000e+01 : f32
    %11 = vector.broadcast %cst_9 : f32 to vector<16x1xf32>
    %12 = arith.divf %10, %11 : vector<16x1xf32>
    %13 = arith.mulf %7, %7 : vector<16x1xf32>
    %14 = arith.subf %12, %13 : vector<16x1xf32>
    %15 = vector.broadcast %7 : vector<16x1xf32> to vector<16x32xf32>
    %16 = arith.subf %0, %15 : vector<16x32xf32>
    %cst_10 = arith.constant 9.99999974E-6 : f32
    %17 = vector.broadcast %cst_10 : f32 to vector<16x1xf32>
    %18 = arith.addf %14, %17 : vector<16x1xf32>
    %19 = math.rsqrt %18 : vector<16x1xf32>
    %20 = vector.broadcast %19 : vector<16x1xf32> to vector<16x32xf32>
    %21 = arith.mulf %16, %20 : vector<16x32xf32>
    %22 = vector.broadcast %1 : vector<1x32xf32> to vector<16x32xf32>
    %23 = arith.mulf %21, %22 : vector<16x32xf32>
    %24 = vector.broadcast %2 : vector<1x32xf32> to vector<16x32xf32>
    %25 = arith.addf %23, %24 : vector<16x32xf32>
    %26 = vector.shape_cast %3 : vector<1x32xf32> to vector<1x32xf32>
    %27 = vector.broadcast %26 : vector<1x32xf32> to vector<8x32xf32>
    %28 = vector.shape_cast %3 : vector<1x32xf32> to vector<1x32xf32>
    %29 = vector.broadcast %28 : vector<1x32xf32> to vector<8x32xf32>
    %c0_11 = arith.constant 0 : index
    %c0_12 = arith.constant 0 : index
    %c0_13 = arith.constant 0 : index
    %c0_14 = arith.constant 0 : index
    %30 = vector.load %arg4[%c0_11, %c0_12, %c0_13, %c0_14] : memref<3x4x32x16xf32, #tpu.memory_space<vmem>>, vector<1x1x32x16xf32>
    %31 = vector.shape_cast %30 : vector<1x1x32x16xf32> to vector<32x16xf32>
    %c1 = arith.constant 1 : index
    %c0_15 = arith.constant 0 : index
    %c0_16 = arith.constant 0 : index
    %c0_17 = arith.constant 0 : index
    %32 = vector.load %arg4[%c1, %c0_15, %c0_16, %c0_17] : memref<3x4x32x16xf32, #tpu.memory_space<vmem>>, vector<1x1x32x16xf32>
    %33 = vector.shape_cast %32 : vector<1x1x32x16xf32> to vector<32x16xf32>
    %c2 = arith.constant 2 : index
    %c0_18 = arith.constant 0 : index
    %c0_19 = arith.constant 0 : index
    %c0_20 = arith.constant 0 : index
    %34 = vector.load %arg4[%c2, %c0_18, %c0_19, %c0_20] : memref<3x4x32x16xf32, #tpu.memory_space<vmem>>, vector<1x1x32x16xf32>
    %35 = vector.shape_cast %34 : vector<1x1x32x16xf32> to vector<32x16xf32>
    %c0_21 = arith.constant 0 : index
    %c0_22 = arith.constant 0 : index
    %c0_23 = arith.constant 0 : index
    %36 = vector.load %arg5[%c0_21, %c0_22, %c0_23] : memref<4x16x32xf32, #tpu.memory_space<vmem>>, vector<1x16x32xf32>
    %37 = vector.shape_cast %36 : vector<1x16x32xf32> to vector<16x32xf32>
    %cst_24 = arith.constant dense<0.000000e+00> : vector<16x16xf32>
    %38 = tpu.matmul %25, %31, %cst_24 {dimension_numbers = #tpu.dot_dimension_numbers<[1], [0], [0], [1], [0, 0, 1, 1], [], []>} : vector<16x32xf32>, vector<32x16xf32>, vector<16x16xf32> -> vector<16x16xf32>
    %cst_25 = arith.constant dense<0.000000e+00> : vector<16x16xf32>
    %39 = tpu.matmul %25, %33, %cst_25 {dimension_numbers = #tpu.dot_dimension_numbers<[1], [0], [0], [1], [0, 0, 1, 1], [], []>} : vector<16x32xf32>, vector<32x16xf32>, vector<16x16xf32> -> vector<16x16xf32>
    %cst_26 = arith.constant dense<0.000000e+00> : vector<16x16xf32>
    %40 = tpu.matmul %25, %35, %cst_26 {dimension_numbers = #tpu.dot_dimension_numbers<[1], [0], [0], [1], [0, 0, 1, 1], [], []>} : vector<16x32xf32>, vector<32x16xf32>, vector<16x16xf32> -> vector<16x16xf32>
    %41 = vector.extract_strided_slice %38 {offsets = [0, 0], sizes = [8, 16], strides = [1, 1]} : vector<16x16xf32> to vector<8x16xf32>
    %42 = vector.extract_strided_slice %39 {offsets = [0, 0], sizes = [8, 16], strides = [1, 1]} : vector<16x16xf32> to vector<8x16xf32>
    %43 = vector.extract_strided_slice %40 {offsets = [0, 0], sizes = [8, 16], strides = [1, 1]} : vector<16x16xf32> to vector<8x16xf32>
    %cst_27 = arith.constant dense<0.000000e+00> : vector<8x8xf32>
    %44 = tpu.matmul %41, %42, %cst_27 {dimension_numbers = #tpu.dot_dimension_numbers<[1], [1], [0], [0], [0, 0, 1, 0], [], []>} : vector<8x16xf32>, vector<8x16xf32>, vector<8x8xf32> -> vector<8x8xf32>
    %cst_28 = arith.constant 2.500000e-01 : f32
    %45 = vector.broadcast %cst_28 : f32 to vector<8x8xf32>
    %46 = arith.mulf %44, %45 : vector<8x8xf32>
    %cst_29 = arith.constant dense<0xFF800000> : vector<8xf32>
    %47 = vector.multi_reduction <maximumf>, %46, %cst_29 [1] : vector<8x8xf32> to vector<8xf32>
    %48 = vector.shape_cast %47 : vector<8xf32> to vector<8x1xf32>
    %49 = vector.broadcast %48 : vector<8x1xf32> to vector<8x8xf32>
    %50 = arith.subf %46, %49 : vector<8x8xf32>
    %51 = math.exp %50 : vector<8x8xf32>
    %cst_30 = arith.constant dense<0.000000e+00> : vector<8xf32>
    %52 = vector.multi_reduction <add>, %51, %cst_30 [1] : vector<8x8xf32> to vector<8xf32>
    %53 = vector.shape_cast %52 : vector<8xf32> to vector<8x1xf32>
    %cst_31 = arith.constant dense<0.000000e+00> : vector<8x16xf32>
    %54 = tpu.matmul %51, %43, %cst_31 {dimension_numbers = #tpu.dot_dimension_numbers<[1], [0], [0], [1], [0, 0, 1, 1], [], []>} : vector<8x8xf32>, vector<8x16xf32>, vector<8x16xf32> -> vector<8x16xf32>
    %55 = tpu.reciprocal %53 {approx = true} : vector<8x1xf32> -> vector<8x1xf32>
    %56 = vector.broadcast %55 : vector<8x1xf32> to vector<8x16xf32>
    %57 = arith.mulf %54, %56 : vector<8x16xf32>
    %cst_32 = arith.constant dense<0.000000e+00> : vector<8x32xf32>
    %58 = tpu.matmul %57, %37, %cst_32 {dimension_numbers = #tpu.dot_dimension_numbers<[1], [0], [0], [1], [0, 0, 1, 1], [], []>} : vector<8x16xf32>, vector<16x32xf32>, vector<8x32xf32> -> vector<8x32xf32>
    %59 = arith.addf %27, %58 : vector<8x32xf32>
    %60 = vector.extract_strided_slice %38 {offsets = [8, 0], sizes = [8, 16], strides = [1, 1]} : vector<16x16xf32> to vector<8x16xf32>
    %61 = vector.extract_strided_slice %39 {offsets = [8, 0], sizes = [8, 16], strides = [1, 1]} : vector<16x16xf32> to vector<8x16xf32>
    %62 = vector.extract_strided_slice %40 {offsets = [8, 0], sizes = [8, 16], strides = [1, 1]} : vector<16x16xf32> to vector<8x16xf32>
    %cst_33 = arith.constant dense<0.000000e+00> : vector<8x8xf32>
    %63 = tpu.matmul %60, %61, %cst_33 {dimension_numbers = #tpu.dot_dimension_numbers<[1], [1], [0], [0], [0, 0, 1, 0], [], []>} : vector<8x16xf32>, vector<8x16xf32>, vector<8x8xf32> -> vector<8x8xf32>
    %cst_34 = arith.constant 2.500000e-01 : f32
    %64 = vector.broadcast %cst_34 : f32 to vector<8x8xf32>
    %65 = arith.mulf %63, %64 : vector<8x8xf32>
    %cst_35 = arith.constant dense<0xFF800000> : vector<8xf32>
    %66 = vector.multi_reduction <maximumf>, %65, %cst_35 [1] : vector<8x8xf32> to vector<8xf32>
    %67 = vector.shape_cast %66 : vector<8xf32> to vector<8x1xf32>
    %68 = vector.broadcast %67 : vector<8x1xf32> to vector<8x8xf32>
    %69 = arith.subf %65, %68 : vector<8x8xf32>
    %70 = math.exp %69 : vector<8x8xf32>
    %cst_36 = arith.constant dense<0.000000e+00> : vector<8xf32>
    %71 = vector.multi_reduction <add>, %70, %cst_36 [1] : vector<8x8xf32> to vector<8xf32>
    %72 = vector.shape_cast %71 : vector<8xf32> to vector<8x1xf32>
    %cst_37 = arith.constant dense<0.000000e+00> : vector<8x16xf32>
    %73 = tpu.matmul %70, %62, %cst_37 {dimension_numbers = #tpu.dot_dimension_numbers<[1], [0], [0], [1], [0, 0, 1, 1], [], []>} : vector<8x8xf32>, vector<8x16xf32>, vector<8x16xf32> -> vector<8x16xf32>
    %74 = tpu.reciprocal %72 {approx = true} : vector<8x1xf32> -> vector<8x1xf32>
    %75 = vector.broadcast %74 : vector<8x1xf32> to vector<8x16xf32>
    %76 = arith.mulf %73, %75 : vector<8x16xf32>
    %cst_38 = arith.constant dense<0.000000e+00> : vector<8x32xf32>
    %77 = tpu.matmul %76, %37, %cst_38 {dimension_numbers = #tpu.dot_dimension_numbers<[1], [0], [0], [1], [0, 0, 1, 1], [], []>} : vector<8x16xf32>, vector<16x32xf32>, vector<8x32xf32> -> vector<8x32xf32>
    %78 = arith.addf %29, %77 : vector<8x32xf32>
    %c0_39 = arith.constant 0 : index
    %c1_40 = arith.constant 1 : index
    %c0_41 = arith.constant 0 : index
    %c0_42 = arith.constant 0 : index
    %79 = vector.load %arg4[%c0_39, %c1_40, %c0_41, %c0_42] : memref<3x4x32x16xf32, #tpu.memory_space<vmem>>, vector<1x1x32x16xf32>
    %80 = vector.shape_cast %79 : vector<1x1x32x16xf32> to vector<32x16xf32>
    %c1_43 = arith.constant 1 : index
    %c1_44 = arith.constant 1 : index
    %c0_45 = arith.constant 0 : index
    %c0_46 = arith.constant 0 : index
    %81 = vector.load %arg4[%c1_43, %c1_44, %c0_45, %c0_46] : memref<3x4x32x16xf32, #tpu.memory_space<vmem>>, vector<1x1x32x16xf32>
    %82 = vector.shape_cast %81 : vector<1x1x32x16xf32> to vector<32x16xf32>
    %c2_47 = arith.constant 2 : index
    %c1_48 = arith.constant 1 : index
    %c0_49 = arith.constant 0 : index
    %c0_50 = arith.constant 0 : index
    %83 = vector.load %arg4[%c2_47, %c1_48, %c0_49, %c0_50] : memref<3x4x32x16xf32, #tpu.memory_space<vmem>>, vector<1x1x32x16xf32>
    %84 = vector.shape_cast %83 : vector<1x1x32x16xf32> to vector<32x16xf32>
    %c1_51 = arith.constant 1 : index
    %c0_52 = arith.constant 0 : index
    %c0_53 = arith.constant 0 : index
    %85 = vector.load %arg5[%c1_51, %c0_52, %c0_53] : memref<4x16x32xf32, #tpu.memory_space<vmem>>, vector<1x16x32xf32>
    %86 = vector.shape_cast %85 : vector<1x16x32xf32> to vector<16x32xf32>
    %cst_54 = arith.constant dense<0.000000e+00> : vector<16x16xf32>
    %87 = tpu.matmul %25, %80, %cst_54 {dimension_numbers = #tpu.dot_dimension_numbers<[1], [0], [0], [1], [0, 0, 1, 1], [], []>} : vector<16x32xf32>, vector<32x16xf32>, vector<16x16xf32> -> vector<16x16xf32>
    %cst_55 = arith.constant dense<0.000000e+00> : vector<16x16xf32>
    %88 = tpu.matmul %25, %82, %cst_55 {dimension_numbers = #tpu.dot_dimension_numbers<[1], [0], [0], [1], [0, 0, 1, 1], [], []>} : vector<16x32xf32>, vector<32x16xf32>, vector<16x16xf32> -> vector<16x16xf32>
    %cst_56 = arith.constant dense<0.000000e+00> : vector<16x16xf32>
    %89 = tpu.matmul %25, %84, %cst_56 {dimension_numbers = #tpu.dot_dimension_numbers<[1], [0], [0], [1], [0, 0, 1, 1], [], []>} : vector<16x32xf32>, vector<32x16xf32>, vector<16x16xf32> -> vector<16x16xf32>
    %90 = vector.extract_strided_slice %87 {offsets = [0, 0], sizes = [8, 16], strides = [1, 1]} : vector<16x16xf32> to vector<8x16xf32>
    %91 = vector.extract_strided_slice %88 {offsets = [0, 0], sizes = [8, 16], strides = [1, 1]} : vector<16x16xf32> to vector<8x16xf32>
    %92 = vector.extract_strided_slice %89 {offsets = [0, 0], sizes = [8, 16], strides = [1, 1]} : vector<16x16xf32> to vector<8x16xf32>
    %cst_57 = arith.constant dense<0.000000e+00> : vector<8x8xf32>
    %93 = tpu.matmul %90, %91, %cst_57 {dimension_numbers = #tpu.dot_dimension_numbers<[1], [1], [0], [0], [0, 0, 1, 0], [], []>} : vector<8x16xf32>, vector<8x16xf32>, vector<8x8xf32> -> vector<8x8xf32>
    %cst_58 = arith.constant 2.500000e-01 : f32
    %94 = vector.broadcast %cst_58 : f32 to vector<8x8xf32>
    %95 = arith.mulf %93, %94 : vector<8x8xf32>
    %cst_59 = arith.constant dense<0xFF800000> : vector<8xf32>
    %96 = vector.multi_reduction <maximumf>, %95, %cst_59 [1] : vector<8x8xf32> to vector<8xf32>
    %97 = vector.shape_cast %96 : vector<8xf32> to vector<8x1xf32>
    %98 = vector.broadcast %97 : vector<8x1xf32> to vector<8x8xf32>
    %99 = arith.subf %95, %98 : vector<8x8xf32>
    %100 = math.exp %99 : vector<8x8xf32>
    %cst_60 = arith.constant dense<0.000000e+00> : vector<8xf32>
    %101 = vector.multi_reduction <add>, %100, %cst_60 [1] : vector<8x8xf32> to vector<8xf32>
    %102 = vector.shape_cast %101 : vector<8xf32> to vector<8x1xf32>
    %cst_61 = arith.constant dense<0.000000e+00> : vector<8x16xf32>
    %103 = tpu.matmul %100, %92, %cst_61 {dimension_numbers = #tpu.dot_dimension_numbers<[1], [0], [0], [1], [0, 0, 1, 1], [], []>} : vector<8x8xf32>, vector<8x16xf32>, vector<8x16xf32> -> vector<8x16xf32>
    %104 = tpu.reciprocal %102 {approx = true} : vector<8x1xf32> -> vector<8x1xf32>
    %105 = vector.broadcast %104 : vector<8x1xf32> to vector<8x16xf32>
    %106 = arith.mulf %103, %105 : vector<8x16xf32>
    %cst_62 = arith.constant dense<0.000000e+00> : vector<8x32xf32>
    %107 = tpu.matmul %106, %86, %cst_62 {dimension_numbers = #tpu.dot_dimension_numbers<[1], [0], [0], [1], [0, 0, 1, 1], [], []>} : vector<8x16xf32>, vector<16x32xf32>, vector<8x32xf32> -> vector<8x32xf32>
    %108 = arith.addf %59, %107 : vector<8x32xf32>
    %109 = vector.extract_strided_slice %87 {offsets = [8, 0], sizes = [8, 16], strides = [1, 1]} : vector<16x16xf32> to vector<8x16xf32>
    %110 = vector.extract_strided_slice %88 {offsets = [8, 0], sizes = [8, 16], strides = [1, 1]} : vector<16x16xf32> to vector<8x16xf32>
    %111 = vector.extract_strided_slice %89 {offsets = [8, 0], sizes = [8, 16], strides = [1, 1]} : vector<16x16xf32> to vector<8x16xf32>
    %cst_63 = arith.constant dense<0.000000e+00> : vector<8x8xf32>
    %112 = tpu.matmul %109, %110, %cst_63 {dimension_numbers = #tpu.dot_dimension_numbers<[1], [1], [0], [0], [0, 0, 1, 0], [], []>} : vector<8x16xf32>, vector<8x16xf32>, vector<8x8xf32> -> vector<8x8xf32>
    %cst_64 = arith.constant 2.500000e-01 : f32
    %113 = vector.broadcast %cst_64 : f32 to vector<8x8xf32>
    %114 = arith.mulf %112, %113 : vector<8x8xf32>
    %cst_65 = arith.constant dense<0xFF800000> : vector<8xf32>
    %115 = vector.multi_reduction <maximumf>, %114, %cst_65 [1] : vector<8x8xf32> to vector<8xf32>
    %116 = vector.shape_cast %115 : vector<8xf32> to vector<8x1xf32>
    %117 = vector.broadcast %116 : vector<8x1xf32> to vector<8x8xf32>
    %118 = arith.subf %114, %117 : vector<8x8xf32>
    %119 = math.exp %118 : vector<8x8xf32>
    %cst_66 = arith.constant dense<0.000000e+00> : vector<8xf32>
    %120 = vector.multi_reduction <add>, %119, %cst_66 [1] : vector<8x8xf32> to vector<8xf32>
    %121 = vector.shape_cast %120 : vector<8xf32> to vector<8x1xf32>
    %cst_67 = arith.constant dense<0.000000e+00> : vector<8x16xf32>
    %122 = tpu.matmul %119, %111, %cst_67 {dimension_numbers = #tpu.dot_dimension_numbers<[1], [0], [0], [1], [0, 0, 1, 1], [], []>} : vector<8x8xf32>, vector<8x16xf32>, vector<8x16xf32> -> vector<8x16xf32>
    %123 = tpu.reciprocal %121 {approx = true} : vector<8x1xf32> -> vector<8x1xf32>
    %124 = vector.broadcast %123 : vector<8x1xf32> to vector<8x16xf32>
    %125 = arith.mulf %122, %124 : vector<8x16xf32>
    %cst_68 = arith.constant dense<0.000000e+00> : vector<8x32xf32>
    %126 = tpu.matmul %125, %86, %cst_68 {dimension_numbers = #tpu.dot_dimension_numbers<[1], [0], [0], [1], [0, 0, 1, 1], [], []>} : vector<8x16xf32>, vector<16x32xf32>, vector<8x32xf32> -> vector<8x32xf32>
    %127 = arith.addf %78, %126 : vector<8x32xf32>
    %c0_69 = arith.constant 0 : index
    %c2_70 = arith.constant 2 : index
    %c0_71 = arith.constant 0 : index
    %c0_72 = arith.constant 0 : index
    %128 = vector.load %arg4[%c0_69, %c2_70, %c0_71, %c0_72] : memref<3x4x32x16xf32, #tpu.memory_space<vmem>>, vector<1x1x32x16xf32>
    %129 = vector.shape_cast %128 : vector<1x1x32x16xf32> to vector<32x16xf32>
    %c1_73 = arith.constant 1 : index
    %c2_74 = arith.constant 2 : index
    %c0_75 = arith.constant 0 : index
    %c0_76 = arith.constant 0 : index
    %130 = vector.load %arg4[%c1_73, %c2_74, %c0_75, %c0_76] : memref<3x4x32x16xf32, #tpu.memory_space<vmem>>, vector<1x1x32x16xf32>
    %131 = vector.shape_cast %130 : vector<1x1x32x16xf32> to vector<32x16xf32>
    %c2_77 = arith.constant 2 : index
    %c2_78 = arith.constant 2 : index
    %c0_79 = arith.constant 0 : index
    %c0_80 = arith.constant 0 : index
    %132 = vector.load %arg4[%c2_77, %c2_78, %c0_79, %c0_80] : memref<3x4x32x16xf32, #tpu.memory_space<vmem>>, vector<1x1x32x16xf32>
    %133 = vector.shape_cast %132 : vector<1x1x32x16xf32> to vector<32x16xf32>
    %c2_81 = arith.constant 2 : index
    %c0_82 = arith.constant 0 : index
    %c0_83 = arith.constant 0 : index
    %134 = vector.load %arg5[%c2_81, %c0_82, %c0_83] : memref<4x16x32xf32, #tpu.memory_space<vmem>>, vector<1x16x32xf32>
    %135 = vector.shape_cast %134 : vector<1x16x32xf32> to vector<16x32xf32>
    %cst_84 = arith.constant dense<0.000000e+00> : vector<16x16xf32>
    %136 = tpu.matmul %25, %129, %cst_84 {dimension_numbers = #tpu.dot_dimension_numbers<[1], [0], [0], [1], [0, 0, 1, 1], [], []>} : vector<16x32xf32>, vector<32x16xf32>, vector<16x16xf32> -> vector<16x16xf32>
    %cst_85 = arith.constant dense<0.000000e+00> : vector<16x16xf32>
    %137 = tpu.matmul %25, %131, %cst_85 {dimension_numbers = #tpu.dot_dimension_numbers<[1], [0], [0], [1], [0, 0, 1, 1], [], []>} : vector<16x32xf32>, vector<32x16xf32>, vector<16x16xf32> -> vector<16x16xf32>
    %cst_86 = arith.constant dense<0.000000e+00> : vector<16x16xf32>
    %138 = tpu.matmul %25, %133, %cst_86 {dimension_numbers = #tpu.dot_dimension_numbers<[1], [0], [0], [1], [0, 0, 1, 1], [], []>} : vector<16x32xf32>, vector<32x16xf32>, vector<16x16xf32> -> vector<16x16xf32>
    %139 = vector.extract_strided_slice %136 {offsets = [0, 0], sizes = [8, 16], strides = [1, 1]} : vector<16x16xf32> to vector<8x16xf32>
    %140 = vector.extract_strided_slice %137 {offsets = [0, 0], sizes = [8, 16], strides = [1, 1]} : vector<16x16xf32> to vector<8x16xf32>
    %141 = vector.extract_strided_slice %138 {offsets = [0, 0], sizes = [8, 16], strides = [1, 1]} : vector<16x16xf32> to vector<8x16xf32>
    %cst_87 = arith.constant dense<0.000000e+00> : vector<8x8xf32>
    %142 = tpu.matmul %139, %140, %cst_87 {dimension_numbers = #tpu.dot_dimension_numbers<[1], [1], [0], [0], [0, 0, 1, 0], [], []>} : vector<8x16xf32>, vector<8x16xf32>, vector<8x8xf32> -> vector<8x8xf32>
    %cst_88 = arith.constant 2.500000e-01 : f32
    %143 = vector.broadcast %cst_88 : f32 to vector<8x8xf32>
    %144 = arith.mulf %142, %143 : vector<8x8xf32>
    %cst_89 = arith.constant dense<0xFF800000> : vector<8xf32>
    %145 = vector.multi_reduction <maximumf>, %144, %cst_89 [1] : vector<8x8xf32> to vector<8xf32>
    %146 = vector.shape_cast %145 : vector<8xf32> to vector<8x1xf32>
    %147 = vector.broadcast %146 : vector<8x1xf32> to vector<8x8xf32>
    %148 = arith.subf %144, %147 : vector<8x8xf32>
    %149 = math.exp %148 : vector<8x8xf32>
    %cst_90 = arith.constant dense<0.000000e+00> : vector<8xf32>
    %150 = vector.multi_reduction <add>, %149, %cst_90 [1] : vector<8x8xf32> to vector<8xf32>
    %151 = vector.shape_cast %150 : vector<8xf32> to vector<8x1xf32>
    %cst_91 = arith.constant dense<0.000000e+00> : vector<8x16xf32>
    %152 = tpu.matmul %149, %141, %cst_91 {dimension_numbers = #tpu.dot_dimension_numbers<[1], [0], [0], [1], [0, 0, 1, 1], [], []>} : vector<8x8xf32>, vector<8x16xf32>, vector<8x16xf32> -> vector<8x16xf32>
    %153 = tpu.reciprocal %151 {approx = true} : vector<8x1xf32> -> vector<8x1xf32>
    %154 = vector.broadcast %153 : vector<8x1xf32> to vector<8x16xf32>
    %155 = arith.mulf %152, %154 : vector<8x16xf32>
    %cst_92 = arith.constant dense<0.000000e+00> : vector<8x32xf32>
    %156 = tpu.matmul %155, %135, %cst_92 {dimension_numbers = #tpu.dot_dimension_numbers<[1], [0], [0], [1], [0, 0, 1, 1], [], []>} : vector<8x16xf32>, vector<16x32xf32>, vector<8x32xf32> -> vector<8x32xf32>
    %157 = arith.addf %108, %156 : vector<8x32xf32>
    %158 = vector.extract_strided_slice %136 {offsets = [8, 0], sizes = [8, 16], strides = [1, 1]} : vector<16x16xf32> to vector<8x16xf32>
    %159 = vector.extract_strided_slice %137 {offsets = [8, 0], sizes = [8, 16], strides = [1, 1]} : vector<16x16xf32> to vector<8x16xf32>
    %160 = vector.extract_strided_slice %138 {offsets = [8, 0], sizes = [8, 16], strides = [1, 1]} : vector<16x16xf32> to vector<8x16xf32>
    %cst_93 = arith.constant dense<0.000000e+00> : vector<8x8xf32>
    %161 = tpu.matmul %158, %159, %cst_93 {dimension_numbers = #tpu.dot_dimension_numbers<[1], [1], [0], [0], [0, 0, 1, 0], [], []>} : vector<8x16xf32>, vector<8x16xf32>, vector<8x8xf32> -> vector<8x8xf32>
    %cst_94 = arith.constant 2.500000e-01 : f32
    %162 = vector.broadcast %cst_94 : f32 to vector<8x8xf32>
    %163 = arith.mulf %161, %162 : vector<8x8xf32>
    %cst_95 = arith.constant dense<0xFF800000> : vector<8xf32>
    %164 = vector.multi_reduction <maximumf>, %163, %cst_95 [1] : vector<8x8xf32> to vector<8xf32>
    %165 = vector.shape_cast %164 : vector<8xf32> to vector<8x1xf32>
    %166 = vector.broadcast %165 : vector<8x1xf32> to vector<8x8xf32>
    %167 = arith.subf %163, %166 : vector<8x8xf32>
    %168 = math.exp %167 : vector<8x8xf32>
    %cst_96 = arith.constant dense<0.000000e+00> : vector<8xf32>
    %169 = vector.multi_reduction <add>, %168, %cst_96 [1] : vector<8x8xf32> to vector<8xf32>
    %170 = vector.shape_cast %169 : vector<8xf32> to vector<8x1xf32>
    %cst_97 = arith.constant dense<0.000000e+00> : vector<8x16xf32>
    %171 = tpu.matmul %168, %160, %cst_97 {dimension_numbers = #tpu.dot_dimension_numbers<[1], [0], [0], [1], [0, 0, 1, 1], [], []>} : vector<8x8xf32>, vector<8x16xf32>, vector<8x16xf32> -> vector<8x16xf32>
    %172 = tpu.reciprocal %170 {approx = true} : vector<8x1xf32> -> vector<8x1xf32>
    %173 = vector.broadcast %172 : vector<8x1xf32> to vector<8x16xf32>
    %174 = arith.mulf %171, %173 : vector<8x16xf32>
    %cst_98 = arith.constant dense<0.000000e+00> : vector<8x32xf32>
    %175 = tpu.matmul %174, %135, %cst_98 {dimension_numbers = #tpu.dot_dimension_numbers<[1], [0], [0], [1], [0, 0, 1, 1], [], []>} : vector<8x16xf32>, vector<16x32xf32>, vector<8x32xf32> -> vector<8x32xf32>
    %176 = arith.addf %127, %175 : vector<8x32xf32>
    %c0_99 = arith.constant 0 : index
    %c3 = arith.constant 3 : index
    %c0_100 = arith.constant 0 : index
    %c0_101 = arith.constant 0 : index
    %177 = vector.load %arg4[%c0_99, %c3, %c0_100, %c0_101] : memref<3x4x32x16xf32, #tpu.memory_space<vmem>>, vector<1x1x32x16xf32>
    %178 = vector.shape_cast %177 : vector<1x1x32x16xf32> to vector<32x16xf32>
    %c1_102 = arith.constant 1 : index
    %c3_103 = arith.constant 3 : index
    %c0_104 = arith.constant 0 : index
    %c0_105 = arith.constant 0 : index
    %179 = vector.load %arg4[%c1_102, %c3_103, %c0_104, %c0_105] : memref<3x4x32x16xf32, #tpu.memory_space<vmem>>, vector<1x1x32x16xf32>
    %180 = vector.shape_cast %179 : vector<1x1x32x16xf32> to vector<32x16xf32>
    %c2_106 = arith.constant 2 : index
    %c3_107 = arith.constant 3 : index
    %c0_108 = arith.constant 0 : index
    %c0_109 = arith.constant 0 : index
    %181 = vector.load %arg4[%c2_106, %c3_107, %c0_108, %c0_109] : memref<3x4x32x16xf32, #tpu.memory_space<vmem>>, vector<1x1x32x16xf32>
    %182 = vector.shape_cast %181 : vector<1x1x32x16xf32> to vector<32x16xf32>
    %c3_110 = arith.constant 3 : index
    %c0_111 = arith.constant 0 : index
    %c0_112 = arith.constant 0 : index
    %183 = vector.load %arg5[%c3_110, %c0_111, %c0_112] : memref<4x16x32xf32, #tpu.memory_space<vmem>>, vector<1x16x32xf32>
    %184 = vector.shape_cast %183 : vector<1x16x32xf32> to vector<16x32xf32>
    %cst_113 = arith.constant dense<0.000000e+00> : vector<16x16xf32>
    %185 = tpu.matmul %25, %178, %cst_113 {dimension_numbers = #tpu.dot_dimension_numbers<[1], [0], [0], [1], [0, 0, 1, 1], [], []>} : vector<16x32xf32>, vector<32x16xf32>, vector<16x16xf32> -> vector<16x16xf32>
    %cst_114 = arith.constant dense<0.000000e+00> : vector<16x16xf32>
    %186 = tpu.matmul %25, %180, %cst_114 {dimension_numbers = #tpu.dot_dimension_numbers<[1], [0], [0], [1], [0, 0, 1, 1], [], []>} : vector<16x32xf32>, vector<32x16xf32>, vector<16x16xf32> -> vector<16x16xf32>
    %cst_115 = arith.constant dense<0.000000e+00> : vector<16x16xf32>
    %187 = tpu.matmul %25, %182, %cst_115 {dimension_numbers = #tpu.dot_dimension_numbers<[1], [0], [0], [1], [0, 0, 1, 1], [], []>} : vector<16x32xf32>, vector<32x16xf32>, vector<16x16xf32> -> vector<16x16xf32>
    %188 = vector.extract_strided_slice %185 {offsets = [0, 0], sizes = [8, 16], strides = [1, 1]} : vector<16x16xf32> to vector<8x16xf32>
    %189 = vector.extract_strided_slice %186 {offsets = [0, 0], sizes = [8, 16], strides = [1, 1]} : vector<16x16xf32> to vector<8x16xf32>
    %190 = vector.extract_strided_slice %187 {offsets = [0, 0], sizes = [8, 16], strides = [1, 1]} : vector<16x16xf32> to vector<8x16xf32>
    %cst_116 = arith.constant dense<0.000000e+00> : vector<8x8xf32>
    %191 = tpu.matmul %188, %189, %cst_116 {dimension_numbers = #tpu.dot_dimension_numbers<[1], [1], [0], [0], [0, 0, 1, 0], [], []>} : vector<8x16xf32>, vector<8x16xf32>, vector<8x8xf32> -> vector<8x8xf32>
    %cst_117 = arith.constant 2.500000e-01 : f32
    %192 = vector.broadcast %cst_117 : f32 to vector<8x8xf32>
    %193 = arith.mulf %191, %192 : vector<8x8xf32>
    %cst_118 = arith.constant dense<0xFF800000> : vector<8xf32>
    %194 = vector.multi_reduction <maximumf>, %193, %cst_118 [1] : vector<8x8xf32> to vector<8xf32>
    %195 = vector.shape_cast %194 : vector<8xf32> to vector<8x1xf32>
    %196 = vector.broadcast %195 : vector<8x1xf32> to vector<8x8xf32>
    %197 = arith.subf %193, %196 : vector<8x8xf32>
    %198 = math.exp %197 : vector<8x8xf32>
    %cst_119 = arith.constant dense<0.000000e+00> : vector<8xf32>
    %199 = vector.multi_reduction <add>, %198, %cst_119 [1] : vector<8x8xf32> to vector<8xf32>
    %200 = vector.shape_cast %199 : vector<8xf32> to vector<8x1xf32>
    %cst_120 = arith.constant dense<0.000000e+00> : vector<8x16xf32>
    %201 = tpu.matmul %198, %190, %cst_120 {dimension_numbers = #tpu.dot_dimension_numbers<[1], [0], [0], [1], [0, 0, 1, 1], [], []>} : vector<8x8xf32>, vector<8x16xf32>, vector<8x16xf32> -> vector<8x16xf32>
    %202 = tpu.reciprocal %200 {approx = true} : vector<8x1xf32> -> vector<8x1xf32>
    %203 = vector.broadcast %202 : vector<8x1xf32> to vector<8x16xf32>
    %204 = arith.mulf %201, %203 : vector<8x16xf32>
    %cst_121 = arith.constant dense<0.000000e+00> : vector<8x32xf32>
    %205 = tpu.matmul %204, %184, %cst_121 {dimension_numbers = #tpu.dot_dimension_numbers<[1], [0], [0], [1], [0, 0, 1, 1], [], []>} : vector<8x16xf32>, vector<16x32xf32>, vector<8x32xf32> -> vector<8x32xf32>
    %206 = arith.addf %157, %205 : vector<8x32xf32>
    %207 = vector.extract_strided_slice %185 {offsets = [8, 0], sizes = [8, 16], strides = [1, 1]} : vector<16x16xf32> to vector<8x16xf32>
    %208 = vector.extract_strided_slice %186 {offsets = [8, 0], sizes = [8, 16], strides = [1, 1]} : vector<16x16xf32> to vector<8x16xf32>
    %209 = vector.extract_strided_slice %187 {offsets = [8, 0], sizes = [8, 16], strides = [1, 1]} : vector<16x16xf32> to vector<8x16xf32>
    %cst_122 = arith.constant dense<0.000000e+00> : vector<8x8xf32>
    %210 = tpu.matmul %207, %208, %cst_122 {dimension_numbers = #tpu.dot_dimension_numbers<[1], [1], [0], [0], [0, 0, 1, 0], [], []>} : vector<8x16xf32>, vector<8x16xf32>, vector<8x8xf32> -> vector<8x8xf32>
    %cst_123 = arith.constant 2.500000e-01 : f32
    %211 = vector.broadcast %cst_123 : f32 to vector<8x8xf32>
    %212 = arith.mulf %210, %211 : vector<8x8xf32>
    %cst_124 = arith.constant dense<0xFF800000> : vector<8xf32>
    %213 = vector.multi_reduction <maximumf>, %212, %cst_124 [1] : vector<8x8xf32> to vector<8xf32>
    %214 = vector.shape_cast %213 : vector<8xf32> to vector<8x1xf32>
    %215 = vector.broadcast %214 : vector<8x1xf32> to vector<8x8xf32>
    %216 = arith.subf %212, %215 : vector<8x8xf32>
    %217 = math.exp %216 : vector<8x8xf32>
    %cst_125 = arith.constant dense<0.000000e+00> : vector<8xf32>
    %218 = vector.multi_reduction <add>, %217, %cst_125 [1] : vector<8x8xf32> to vector<8xf32>
    %219 = vector.shape_cast %218 : vector<8xf32> to vector<8x1xf32>
    %cst_126 = arith.constant dense<0.000000e+00> : vector<8x16xf32>
    %220 = tpu.matmul %217, %209, %cst_126 {dimension_numbers = #tpu.dot_dimension_numbers<[1], [0], [0], [1], [0, 0, 1, 1], [], []>} : vector<8x8xf32>, vector<8x16xf32>, vector<8x16xf32> -> vector<8x16xf32>
    %221 = tpu.reciprocal %219 {approx = true} : vector<8x1xf32> -> vector<8x1xf32>
    %222 = vector.broadcast %221 : vector<8x1xf32> to vector<8x16xf32>
    %223 = arith.mulf %220, %222 : vector<8x16xf32>
    %cst_127 = arith.constant dense<0.000000e+00> : vector<8x32xf32>
    %224 = tpu.matmul %223, %184, %cst_127 {dimension_numbers = #tpu.dot_dimension_numbers<[1], [0], [0], [1], [0, 0, 1, 1], [], []>} : vector<8x16xf32>, vector<16x32xf32>, vector<8x32xf32> -> vector<8x32xf32>
    %225 = arith.addf %176, %224 : vector<8x32xf32>
    %c0_128 = arith.constant 0 : index
    %c0_129 = arith.constant 0 : index
    %226 = vector.load %arg7[%c0_128, %c0_129] : memref<16x32xf32, #tpu.memory_space<vmem>>, vector<8x32xf32>
    tpu.vector_store %arg7[%c0_128, %c0_129], %206 {strides = array<i32>} : memref<16x32xf32, #tpu.memory_space<vmem>>, vector<8x32xf32>,
    %c8 = arith.constant 8 : index
    %c0_130 = arith.constant 0 : index
    %227 = vector.load %arg7[%c8, %c0_130] : memref<16x32xf32, #tpu.memory_space<vmem>>, vector<8x32xf32>
    tpu.vector_store %arg7[%c8, %c0_130], %225 {strides = array<i32>} : memref<16x32xf32, #tpu.memory_space<vmem>>, vector<8x32xf32>,
    return
  }
  func.func @transform_0(%arg0: i32) -> (i32, i32) {
    %c0_i32 = arith.constant 0 : i32
    %c0_i32_0 = arith.constant 0 : i32
    %c0_i32_1 = arith.constant 0 : i32
    return %c0_i32, %c0_i32_0 : i32, i32
  }
  func.func @transform_1(%arg0: i32) -> (i32, i32) {
    %c0_i32 = arith.constant 0 : i32
    %c0_i32_0 = arith.constant 0 : i32
    %c0_i32_1 = arith.constant 0 : i32
    return %c0_i32, %c0_i32_0 : i32, i32
  }
  func.func @transform_2(%arg0: i32) -> (i32, i32) {
    %c0_i32 = arith.constant 0 : i32
    %c0_i32_0 = arith.constant 0 : i32
    %c0_i32_1 = arith.constant 0 : i32
    return %c0_i32, %c0_i32_0 : i32, i32
  }
  func.func @transform_3(%arg0: i32) -> (i32, i32, i32, i32) {
    %c0_i32 = arith.constant 0 : i32
    %c0_i32_0 = arith.constant 0 : i32
    %c0_i32_1 = arith.constant 0 : i32
    %c0_i32_2 = arith.constant 0 : i32
    %c0_i32_3 = arith.constant 0 : i32
    return %c0_i32, %c0_i32_0, %c0_i32_1, %c0_i32_2 : i32, i32, i32, i32
  }
  func.func @transform_4(%arg0: i32) -> (i32, i32, i32) {
    %c0_i32 = arith.constant 0 : i32
    %c0_i32_0 = arith.constant 0 : i32
    %c0_i32_1 = arith.constant 0 : i32
    %c0_i32_2 = arith.constant 0 : i32
    return %c0_i32, %c0_i32_0, %c0_i32_1 : i32, i32, i32
  }
  func.func @transform_5(%arg0: i32) -> (i32, i32) {
    %c0_i32 = arith.constant 0 : i32
    %c0_i32_0 = arith.constant 0 : i32
    %c0_i32_1 = arith.constant 0 : i32
    return %c0_i32, %c0_i32_0 : i32, i32
  }
  func.func @transform_6(%arg0: i32) -> (i32, i32) {
    %c0_i32 = arith.constant 0 : i32
    %c0_i32_0 = arith.constant 0 : i32
    %c0_i32_1 = arith.constant 0 : i32
    return %c0_i32, %c0_i32_0 : i32, i32
  }
}

</mosaic_0001>

<llo_original>
// kernel: tpu_custom_call.1
$region0: #{tpu_custom_call.1}
  #allocation0 [shape = 'u32[]', space=smem, size = 0x4, offset = 0x4, fixed_abs, tag = 'smem constant byte address 0x4 - core index']
  #allocation1 [shape = 'u32[72,128]{1,0:T(1,128)}', space=vmem, size = 0x9000, scoped, tag = 'internal scratch']
  %s0 = inlined_call_operand.vmem [shape: f32[16,32], index: 0, kind: input, shape index: {}]
  %s1 = inlined_call_operand.vmem [shape: f32[1,32], index: 1, kind: input, shape index: {}]
  %s2 = inlined_call_operand.vmem [shape: f32[1,32], index: 2, kind: input, shape index: {}]
  %s3 = inlined_call_operand.vmem [shape: f32[3,4,32,16], index: 3, kind: input, shape index: {}]
  %s4 = inlined_call_operand.vmem [shape: f32[4,16,32], index: 4, kind: input, shape index: {}]
  %s5 = inlined_call_operand.vmem [shape: f32[1,32], index: 5, kind: input, shape index: {}]
  %s6 = inlined_call_operand.hbm [shape: f32[16,32], index: 6, kind: output, shape index: {}]
  %s7 = sld [smem:[#allocation0]]
  $region34: #{tpu_custom_call.1} parent=0
    _
  %s9 = ssub.s32 1, %s7
  %s10 = scalar_select 0, %s9, %s7
  $region1: #{tpu_custom_call.1} parent=0
    #allocation2 [shape = 'u8[8192]{0}', space=vmem, size = 0x2000, scoped, tag = 'output window, operand 0, single buffered']
    #allocation3 [shape = 's32[1]{0}', space=sflag, size = 0x4, scoped, tag = 'scoped memory for tpu_custom_call.1']
    %11 = vsyncpa [#allocation3], 0
    // Predicated region
    $region2: #{tpu_custom_call.1} parent=1 // pred_check
      _
    $region3: #{tpu_custom_call.1} parent=1 // pred_check_branch
      %13 = sbr.rel (0) target = $region5
    $region4: #{tpu_custom_call.1} parent=1 // pred_region
      _
    $region5: #{tpu_custom_call.1} parent=1 // pred_fallthru
      _
    // Predicated region
    $region6: #{tpu_custom_call.1} parent=1 // pred_check
      _
    $region7: #{tpu_custom_call.1} parent=1 // pred_check_branch
      %15 = sbr.rel (0) target = $region9
    $region8: #{tpu_custom_call.1} parent=1 // pred_region
      _
    $region9: #{tpu_custom_call.1} parent=1 // pred_fallthru
      _
    // Predicated region
    $region10: #{tpu_custom_call.1} parent=1 // pred_check
      _
    $region11: #{tpu_custom_call.1} parent=1 // pred_check_branch
      %17 = sbr.rel (0) target = $region13
    $region12: #{tpu_custom_call.1} parent=1 // pred_region
      _
    $region13: #{tpu_custom_call.1} parent=1 // pred_fallthru
      _
    // Predicated region
    $region14: #{tpu_custom_call.1} parent=1 // pred_check
      _
    $region15: #{tpu_custom_call.1} parent=1 // pred_check_branch
      %19 = sbr.rel (0) target = $region17
    $region16: #{tpu_custom_call.1} parent=1 // pred_region
      _
    $region17: #{tpu_custom_call.1} parent=1 // pred_fallthru
      _
    // Predicated region
    $region18: #{tpu_custom_call.1} parent=1 // pred_check
      _
    $region19: #{tpu_custom_call.1} parent=1 // pred_check_branch
      %21 = sbr.rel (0) target = $region21
    $region20: #{tpu_custom_call.1} parent=1 // pred_region
      _
    $region21: #{tpu_custom_call.1} parent=1 // pred_fallthru
      _
    // Predicated region
    $region22: #{tpu_custom_call.1} parent=1 // pred_check
      _
    $region23: #{tpu_custom_call.1} parent=1 // pred_check_branch
      %23 = sbr.rel (0) target = $region25
    $region24: #{tpu_custom_call.1} parent=1 // pred_region
      _
    $region25: #{tpu_custom_call.1} parent=1 // pred_fallthru
      _
    %v24 = vld [vmem:[%s0] sm:$0xff]
    %v25 = vld [vmem:[%s0 + $0x8] sm:$0xff]
    %v26 = vld [vmem:[%s1] sm:$0x1]
    %v27 = vld [vmem:[%s2] sm:$0x1]
    %v28 = vld [vmem:[%s5] sm:$0x1]
    %vm29 = vcmask 261120
    %v30 = vsel %vm29, %v24, 0.0
    %31 = vadd.xlane.f32.xlu0 %v30
    %v32 = vpop.xlane.xlu0 %31
    %v33 = vsel %vm29, %v25, 0.0
    %34 = vadd.xlane.f32.xlu0 %v33
    %v35 = vpop.xlane.xlu0 %34
    %v36 = vrcp.pop 32.0
    %v37 = vmul.f32 32.0, %v36
    %v38 = vsub.f32 1.0, %v37
    %v39 = vmul.f32 %v36, %v38
    %v40 = vadd.f32 %v36, %v39
    %vm41 = vweird.f32 %v36
    %v42 = vsel %vm41, %v36, %v40
    %v43 = vmul.f32 %v32, %v42
    %v44 = vmul.f32 %v35, %v42
    %v45 = vmul.f32 %v24, %v24
    %v46 = vmul.f32 %v25, %v25
    %v47 = vsel %vm29, %v45, 0.0
    %48 = vadd.xlane.f32.xlu0 %v47
    %v49 = vpop.xlane.xlu0 %48
    %v50 = vsel %vm29, %v46, 0.0
    %51 = vadd.xlane.f32.xlu0 %v50
    %v52 = vpop.xlane.xlu0 %51
    %v53 = vmul.f32 %v49, %v42
    %v54 = vmul.f32 %v52, %v42
    %v55 = vmul.f32 %v43, %v43
    %v56 = vmul.f32 %v44, %v44
    %v57 = vsub.f32 %v53, %v55
    %v58 = vsub.f32 %v54, %v56
    %v59 = vsub.f32 %v24, %v43
    %v60 = vsub.f32 %v25, %v44
    %v61 = vadd.f32 %v57, 1e-05
    %v62 = vadd.f32 %v58, 1e-05
    %v63 = vrsqrt.pop %v61
    %v64 = vmul.f32 %v63, %v61
    %v65 = vmul.f32 %v64, %v63
    %v66 = vmul.f32 0.5, %v65
    %v67 = vsub.f32 1.5, %v66
    %v68 = vmul.f32 %v63, %v67
    %vm69 = vweird.f32 %v61
    %vm70 = vweird.f32 %v63
    %vm71 = vmor %vm69, %vm70
    %v72 = vsel %vm71, %v63, %v68
    %v73 = vrsqrt.pop %v62
    %v74 = vmul.f32 %v73, %v62
    %v75 = vmul.f32 %v74, %v73
    %v76 = vmul.f32 0.5, %v75
    %v77 = vsub.f32 1.5, %v76
    %v78 = vmul.f32 %v73, %v77
    %vm79 = vweird.f32 %v62
    %vm80 = vweird.f32 %v73
    %vm81 = vmor %vm79, %vm80
    %v82 = vsel %vm81, %v73, %v78
    %v83 = vmul.f32 %v59, %v72
    %v84 = vmul.f32 %v60, %v82
    %v86 = vperm.slane %v26, 0
    %v88 = vmul.f32 %v83, %v86
    %v89 = vmul.f32 %v84, %v86
    %v91 = vperm.slane %v27, 0
    %v93 = vadd.f32 %v88, %v91
    %v94 = vadd.f32 %v89, %v91
    %v96 = vperm.slane %v28, 0
    %v98 = vld [vmem:[%s3] sm:$0xff]
    %v99 = vld [vmem:[%s3 + $0x8] sm:$0xff]
    %v100 = vld [vmem:[%s3 + $0x10] sm:$0xff]
    %v101 = vld [vmem:[%s3 + $0x18] sm:$0xff]
    %s102 = scalar_lea.vmem %s3, 128
    %v103 = vld [vmem:[%s102] sm:$0xff]
    %v104 = vld [vmem:[%s102 + $0x8] sm:$0xff]
    %v105 = vld [vmem:[%s102 + $0x10] sm:$0xff]
    %v106 = vld [vmem:[%s102 + $0x18] sm:$0xff]
    %s107 = scalar_lea.vmem %s3, 256
    %v108 = vld [vmem:[%s107] sm:$0xff]
    %v109 = vld [vmem:[%s107 + $0x8] sm:$0xff]
    %v110 = vld [vmem:[%s107 + $0x10] sm:$0xff]
    %v111 = vld [vmem:[%s107 + $0x18] sm:$0xff]
    %v112 = vld [vmem:[%s4] sm:$0xff]
    %v113 = vld [vmem:[%s4 + $0x8] sm:$0xff]
    %v115 = vsel %vm29, %v93, 0
    %v118 = vsel %vm29, %v94, 0
    %120 = vmatpush.msra.mxu0 0.0
    %121 = vmatpush.msra.mxu0 0.0
    %122 = vmatpush.msra.mxu0 0.0
    %123 = vmatpush.msra.mxu0 0.0
    %124 = vmatpush.msra.mxu0 0.0
    %125 = vmatpush.msra.mxu0 0.0
    %126 = vmatpush.msra.mxu0 0.0
    %127 = vmatpush.msra.mxu0 0.0
    %128 = vmatpush.msra.mxu0 0.0
    %129 = vmatpush.msra.mxu0 0.0
    %130 = vmatpush.msra.mxu0 0.0
    %131 = vmatpush.msra.mxu0 0.0
    %132 = vmatpush.msra.mxu0 %v101
    %133 = vmatpush.msra.mxu0 %v100
    %134 = vmatpush.msra.mxu0 %v99
    %135 = vmatpush.msra.mxu0 %v98
    %136 = vmatmul.f32.gmra.mxu0 %v115
    %v137 = vpop.f32.mrf.mxu0
    %v138 = vadd.f32 0.0, %v137
    %139 = vmatmul.f32.gmra.mxu0 %v118
    %v140 = vpop.f32.mrf.mxu0
    %v141 = vadd.f32 0.0, %v140
    %142 = vdwg.mxu0
    %143 = vmatpush.msra.mxu0 0.0
    %144 = vmatpush.msra.mxu0 0.0
    %145 = vmatpush.msra.mxu0 0.0
    %146 = vmatpush.msra.mxu0 0.0
    %147 = vmatpush.msra.mxu0 0.0
    %148 = vmatpush.msra.mxu0 0.0
    %149 = vmatpush.msra.mxu0 0.0
    %150 = vmatpush.msra.mxu0 0.0
    %151 = vmatpush.msra.mxu0 0.0
    %152 = vmatpush.msra.mxu0 0.0
    %153 = vmatpush.msra.mxu0 0.0
    %154 = vmatpush.msra.mxu0 0.0
    %155 = vmatpush.msra.mxu0 %v106
    %156 = vmatpush.msra.mxu0 %v105
    %157 = vmatpush.msra.mxu0 %v104
    %158 = vmatpush.msra.mxu0 %v103
    %159 = vmatmul.f32.gmra.mxu0 %v115
    %v160 = vpop.f32.mrf.mxu0
    %v161 = vadd.f32 0.0, %v160
    %162 = vmatmul.f32.gmra.mxu0 %v118
    %v163 = vpop.f32.mrf.mxu0
    %v164 = vadd.f32 0.0, %v163
    %165 = vdwg.mxu0
    %166 = vmatpush.msra.mxu0 0.0
    %167 = vmatpush.msra.mxu0 0.0
    %168 = vmatpush.msra.mxu0 0.0
    %169 = vmatpush.msra.mxu0 0.0
    %170 = vmatpush.msra.mxu0 0.0
    %171 = vmatpush.msra.mxu0 0.0
    %172 = vmatpush.msra.mxu0 0.0
    %173 = vmatpush.msra.mxu0 0.0
    %174 = vmatpush.msra.mxu0 0.0
    %175 = vmatpush.msra.mxu0 0.0
    %176 = vmatpush.msra.mxu0 0.0
    %177 = vmatpush.msra.mxu0 0.0
    %178 = vmatpush.msra.mxu0 %v111
    %179 = vmatpush.msra.mxu0 %v110
    %180 = vmatpush.msra.mxu0 %v109
    %181 = vmatpush.msra.mxu0 %v108
    %182 = vmatmul.f32.gmra.mxu0 %v115
    %v183 = vpop.f32.mrf.mxu0
    %v184 = vadd.f32 0.0, %v183
    %185 = vmatmul.f32.gmra.mxu0 %v118
    %v186 = vpop.f32.mrf.mxu0
    %v187 = vadd.f32 0.0, %v186
    %188 = vdwg.mxu0
    %vm189 = vcmask 130048
    %v191 = vsel %vm189, %v138, 0
    %v194 = vsel %vm189, %v161, 0
    %196 = vmatpush.xpose.msra.mxu0 0.0
    %197 = vmatpush.xpose.msra.mxu0 0.0
    %198 = vmatpush.xpose.msra.mxu0 0.0
    %199 = vmatpush.xpose.msra.mxu0 0.0
    %200 = vmatpush.xpose.msra.mxu0 0.0
    %201 = vmatpush.xpose.msra.mxu0 0.0
    %202 = vmatpush.xpose.msra.mxu0 0.0
    %203 = vmatpush.xpose.msra.mxu0 0.0
    %204 = vmatpush.xpose.msra.mxu0 0.0
    %205 = vmatpush.xpose.msra.mxu0 0.0
    %206 = vmatpush.xpose.msra.mxu0 0.0
    %207 = vmatpush.xpose.msra.mxu0 0.0
    %208 = vmatpush.xpose.msra.mxu0 0.0
    %209 = vmatpush.xpose.msra.mxu0 0.0
    %210 = vmatpush.xpose.msra.mxu0 0.0
    %211 = vmatpush.xpose.msra.mxu0 %v194
    %212 = vmatmul.f32.gmra.mxu0 %v191
    %v213 = vpop.f32.mrf.mxu0
    %v214 = vadd.f32 0.0, %v213
    %215 = vdwg.mxu0
    %v216 = vmul.f32 %v214, 0.25
    %vm217 = vcmask 64512
    %v218 = vsel %vm217, %v216, -inf
    %219 = vmax.xlane.f32.xlu0 %v218
    %v220 = vpop.xlane.xlu0 %219
    %v221 = vsub.f32 %v216, %v220
    %v222 = vmul.f32 %v221, 1.442695
    %v223 = vpow.pop %v222
    %v224 = vsel %vm217, %v223, 0.0
    %225 = vadd.xlane.f32.xlu0 %v224
    %v226 = vpop.xlane.xlu0 %225
    %v228 = vsel %vm217, %v223, 0
    %230 = vmatpush.msra.mxu0 0.0
    %231 = vmatpush.msra.mxu0 0.0
    %232 = vmatpush.msra.mxu0 0.0
    %233 = vmatpush.msra.mxu0 0.0
    %234 = vmatpush.msra.mxu0 0.0
    %235 = vmatpush.msra.mxu0 0.0
    %236 = vmatpush.msra.mxu0 0.0
    %237 = vmatpush.msra.mxu0 0.0
    %238 = vmatpush.msra.mxu0 0.0
    %239 = vmatpush.msra.mxu0 0.0
    %240 = vmatpush.msra.mxu0 0.0
    %241 = vmatpush.msra.mxu0 0.0
    %242 = vmatpush.msra.mxu0 0.0
    %243 = vmatpush.msra.mxu0 0.0
    %244 = vmatpush.msra.mxu0 0.0
    %245 = vmatpush.msra.mxu0 %v184
    %246 = vmatmul.f32.gmra.mxu0 %v228
    %v247 = vpop.f32.mrf.mxu0
    %v248 = vadd.f32 0.0, %v247
    %249 = vdwg.mxu0
    %v250 = vrcp.pop %v226
    %v251 = vmul.f32 %v248, %v250
    %v253 = vsel %vm189, %v251, 0
    %255 = vmatpush.msra.mxu0 0.0
    %256 = vmatpush.msra.mxu0 0.0
    %257 = vmatpush.msra.mxu0 0.0
    %258 = vmatpush.msra.mxu0 0.0
    %259 = vmatpush.msra.mxu0 0.0
    %260 = vmatpush.msra.mxu0 0.0
    %261 = vmatpush.msra.mxu0 0.0
    %262 = vmatpush.msra.mxu0 0.0
    %263 = vmatpush.msra.mxu0 0.0
    %264 = vmatpush.msra.mxu0 0.0
    %265 = vmatpush.msra.mxu0 0.0
    %266 = vmatpush.msra.mxu0 0.0
    %267 = vmatpush.msra.mxu0 0.0
    %268 = vmatpush.msra.mxu0 0.0
    %269 = vmatpush.msra.mxu0 %v113
    %270 = vmatpush.msra.mxu0 %v112
    %271 = vmatmul.f32.gmra.mxu0 %v253
    %v272 = vpop.f32.mrf.mxu0
    %v273 = vadd.f32 0.0, %v272
    %274 = vdwg.mxu0
    %v275 = vadd.f32 %v96, %v273
    %v277 = vsel %vm189, %v141, 0
    %v280 = vsel %vm189, %v164, 0
    %282 = vmatpush.xpose.msra.mxu0 0.0
    %283 = vmatpush.xpose.msra.mxu0 0.0
    %284 = vmatpush.xpose.msra.mxu0 0.0
    %285 = vmatpush.xpose.msra.mxu0 0.0
    %286 = vmatpush.xpose.msra.mxu0 0.0
    %287 = vmatpush.xpose.msra.mxu0 0.0
    %288 = vmatpush.xpose.msra.mxu0 0.0
    %289 = vmatpush.xpose.msra.mxu0 0.0
    %290 = vmatpush.xpose.msra.mxu0 0.0
    %291 = vmatpush.xpose.msra.mxu0 0.0
    %292 = vmatpush.xpose.msra.mxu0 0.0
    %293 = vmatpush.xpose.msra.mxu0 0.0
    %294 = vmatpush.xpose.msra.mxu0 0.0
    %295 = vmatpush.xpose.msra.mxu0 0.0
    %296 = vmatpush.xpose.msra.mxu0 0.0
    %297 = vmatpush.xpose.msra.mxu0 %v280
    %298 = vmatmul.f32.gmra.mxu0 %v277
    %v299 = vpop.f32.mrf.mxu0
    %v300 = vadd.f32 0.0, %v299
    %301 = vdwg.mxu0
    %v302 = vmul.f32 %v300, 0.25
    %v303 = vsel %vm217, %v302, -inf
    %304 = vmax.xlane.f32.xlu0 %v303
    %v305 = vpop.xlane.xlu0 %304
    %v306 = vsub.f32 %v302, %v305
    %v307 = vmul.f32 %v306, 1.442695
    %v308 = vpow.pop %v307
    %v309 = vsel %vm217, %v308, 0.0
    %310 = vadd.xlane.f32.xlu0 %v309
    %v311 = vpop.xlane.xlu0 %310
    %v313 = vsel %vm217, %v308, 0
    %315 = vmatpush.msra.mxu0 0.0
    %316 = vmatpush.msra.mxu0 0.0
    %317 = vmatpush.msra.mxu0 0.0
    %318 = vmatpush.msra.mxu0 0.0
    %319 = vmatpush.msra.mxu0 0.0
    %320 = vmatpush.msra.mxu0 0.0
    %321 = vmatpush.msra.mxu0 0.0
    %322 = vmatpush.msra.mxu0 0.0
    %323 = vmatpush.msra.mxu0 0.0
    %324 = vmatpush.msra.mxu0 0.0
    %325 = vmatpush.msra.mxu0 0.0
    %326 = vmatpush.msra.mxu0 0.0
    %327 = vmatpush.msra.mxu0 0.0
    %328 = vmatpush.msra.mxu0 0.0
    %329 = vmatpush.msra.mxu0 0.0
    %330 = vmatpush.msra.mxu0 %v187
    %331 = vmatmul.f32.gmra.mxu0 %v313
    %v332 = vpop.f32.mrf.mxu0
    %v333 = vadd.f32 0.0, %v332
    %334 = vdwg.mxu0
    %v335 = vrcp.pop %v311
    %v336 = vmul.f32 %v333, %v335
    %v338 = vsel %vm189, %v336, 0
    %340 = vmatpush.msra.mxu0 0.0
    %341 = vmatpush.msra.mxu0 0.0
    %342 = vmatpush.msra.mxu0 0.0
    %343 = vmatpush.msra.mxu0 0.0
    %344 = vmatpush.msra.mxu0 0.0
    %345 = vmatpush.msra.mxu0 0.0
    %346 = vmatpush.msra.mxu0 0.0
    %347 = vmatpush.msra.mxu0 0.0
    %348 = vmatpush.msra.mxu0 0.0
    %349 = vmatpush.msra.mxu0 0.0
    %350 = vmatpush.msra.mxu0 0.0
    %351 = vmatpush.msra.mxu0 0.0
    %352 = vmatpush.msra.mxu0 0.0
    %353 = vmatpush.msra.mxu0 0.0
    %354 = vmatpush.msra.mxu0 %v113
    %355 = vmatpush.msra.mxu0 %v112
    %356 = vmatmul.f32.gmra.mxu0 %v338
    %v357 = vpop.f32.mrf.mxu0
    %v358 = vadd.f32 0.0, %v357
    %359 = vdwg.mxu0
    %v360 = vadd.f32 %v96, %v358
    %s361 = scalar_lea.vmem %s3, 32
    %v362 = vld [vmem:[%s361] sm:$0xff]
    %v363 = vld [vmem:[%s361 + $0x8] sm:$0xff]
    %v364 = vld [vmem:[%s361 + $0x10] sm:$0xff]
    %v365 = vld [vmem:[%s361 + $0x18] sm:$0xff]
    %s366 = scalar_lea.vmem %s3, 160
    %v367 = vld [vmem:[%s366] sm:$0xff]
    %v368 = vld [vmem:[%s366 + $0x8] sm:$0xff]
    %v369 = vld [vmem:[%s366 + $0x10] sm:$0xff]
    %v370 = vld [vmem:[%s366 + $0x18] sm:$0xff]
    %s371 = scalar_lea.vmem %s3, 288
    %v372 = vld [vmem:[%s371] sm:$0xff]
    %v373 = vld [vmem:[%s371 + $0x8] sm:$0xff]
    %v374 = vld [vmem:[%s371 + $0x10] sm:$0xff]
    %v375 = vld [vmem:[%s371 + $0x18] sm:$0xff]
    %s376 = scalar_lea.vmem %s4, 16
    %v377 = vld [vmem:[%s376] sm:$0xff]
    %v378 = vld [vmem:[%s376 + $0x8] sm:$0xff]
    %379 = vmatpush.msra.mxu0 0.0
    %380 = vmatpush.msra.mxu0 0.0
    %381 = vmatpush.msra.mxu0 0.0
    %382 = vmatpush.msra.mxu0 0.0
    %383 = vmatpush.msra.mxu0 0.0
    %384 = vmatpush.msra.mxu0 0.0
    %385 = vmatpush.msra.mxu0 0.0
    %386 = vmatpush.msra.mxu0 0.0
    %387 = vmatpush.msra.mxu0 0.0
    %388 = vmatpush.msra.mxu0 0.0
    %389 = vmatpush.msra.mxu0 0.0
    %390 = vmatpush.msra.mxu0 0.0
    %391 = vmatpush.msra.mxu0 %v365
    %392 = vmatpush.msra.mxu0 %v364
    %393 = vmatpush.msra.mxu0 %v363
    %394 = vmatpush.msra.mxu0 %v362
    %395 = vmatmul.f32.gmra.mxu0 %v115
    %v396 = vpop.f32.mrf.mxu0
    %v397 = vadd.f32 0.0, %v396
    %398 = vmatmul.f32.gmra.mxu0 %v118
    %v399 = vpop.f32.mrf.mxu0
    %v400 = vadd.f32 0.0, %v399
    %401 = vdwg.mxu0
    %402 = vmatpush.msra.mxu0 0.0
    %403 = vmatpush.msra.mxu0 0.0
    %404 = vmatpush.msra.mxu0 0.0
    %405 = vmatpush.msra.mxu0 0.0
    %406 = vmatpush.msra.mxu0 0.0
    %407 = vmatpush.msra.mxu0 0.0
    %408 = vmatpush.msra.mxu0 0.0
    %409 = vmatpush.msra.mxu0 0.0
    %410 = vmatpush.msra.mxu0 0.0
    %411 = vmatpush.msra.mxu0 0.0
    %412 = vmatpush.msra.mxu0 0.0
    %413 = vmatpush.msra.mxu0 0.0
    %414 = vmatpush.msra.mxu0 %v370
    %415 = vmatpush.msra.mxu0 %v369
    %416 = vmatpush.msra.mxu0 %v368
    %417 = vmatpush.msra.mxu0 %v367
    %418 = vmatmul.f32.gmra.mxu0 %v115
    %v419 = vpop.f32.mrf.mxu0
    %v420 = vadd.f32 0.0, %v419
    %421 = vmatmul.f32.gmra.mxu0 %v118
    %v422 = vpop.f32.mrf.mxu0
    %v423 = vadd.f32 0.0, %v422
    %424 = vdwg.mxu0
    %425 = vmatpush.msra.mxu0 0.0
    %426 = vmatpush.msra.mxu0 0.0
    %427 = vmatpush.msra.mxu0 0.0
    %428 = vmatpush.msra.mxu0 0.0
    %429 = vmatpush.msra.mxu0 0.0
    %430 = vmatpush.msra.mxu0 0.0
    %431 = vmatpush.msra.mxu0 0.0
    %432 = vmatpush.msra.mxu0 0.0
    %433 = vmatpush.msra.mxu0 0.0
    %434 = vmatpush.msra.mxu0 0.0
    %435 = vmatpush.msra.mxu0 0.0
    %436 = vmatpush.msra.mxu0 0.0
    %437 = vmatpush.msra.mxu0 %v375
    %438 = vmatpush.msra.mxu0 %v374
    %439 = vmatpush.msra.mxu0 %v373
    %440 = vmatpush.msra.mxu0 %v372
    %441 = vmatmul.f32.gmra.mxu0 %v115
    %v442 = vpop.f32.mrf.mxu0
    %v443 = vadd.f32 0.0, %v442
    %444 = vmatmul.f32.gmra.mxu0 %v118
    %v445 = vpop.f32.mrf.mxu0
    %v446 = vadd.f32 0.0, %v445
    %447 = vdwg.mxu0
    %v449 = vsel %vm189, %v397, 0
    %v452 = vsel %vm189, %v420, 0
    %454 = vmatpush.xpose.msra.mxu0 0.0
    %455 = vmatpush.xpose.msra.mxu0 0.0
    %456 = vmatpush.xpose.msra.mxu0 0.0
    %457 = vmatpush.xpose.msra.mxu0 0.0
    %458 = vmatpush.xpose.msra.mxu0 0.0
    %459 = vmatpush.xpose.msra.mxu0 0.0
    %460 = vmatpush.xpose.msra.mxu0 0.0
    %461 = vmatpush.xpose.msra.mxu0 0.0
    %462 = vmatpush.xpose.msra.mxu0 0.0
    %463 = vmatpush.xpose.msra.mxu0 0.0
    %464 = vmatpush.xpose.msra.mxu0 0.0
    %465 = vmatpush.xpose.msra.mxu0 0.0
    %466 = vmatpush.xpose.msra.mxu0 0.0
    %467 = vmatpush.xpose.msra.mxu0 0.0
    %468 = vmatpush.xpose.msra.mxu0 0.0
    %469 = vmatpush.xpose.msra.mxu0 %v452
    %470 = vmatmul.f32.gmra.mxu0 %v449
    %v471 = vpop.f32.mrf.mxu0
    %v472 = vadd.f32 0.0, %v471
    %473 = vdwg.mxu0
    %v474 = vmul.f32 %v472, 0.25
    %v475 = vsel %vm217, %v474, -inf
    %476 = vmax.xlane.f32.xlu0 %v475
    %v477 = vpop.xlane.xlu0 %476
    %v478 = vsub.f32 %v474, %v477
    %v479 = vmul.f32 %v478, 1.442695
    %v480 = vpow.pop %v479
    %v481 = vsel %vm217, %v480, 0.0
    %482 = vadd.xlane.f32.xlu0 %v481
    %v483 = vpop.xlane.xlu0 %482
    %v485 = vsel %vm217, %v480, 0
    %487 = vmatpush.msra.mxu0 0.0
    %488 = vmatpush.msra.mxu0 0.0
    %489 = vmatpush.msra.mxu0 0.0
    %490 = vmatpush.msra.mxu0 0.0
    %491 = vmatpush.msra.mxu0 0.0
    %492 = vmatpush.msra.mxu0 0.0
    %493 = vmatpush.msra.mxu0 0.0
    %494 = vmatpush.msra.mxu0 0.0
    %495 = vmatpush.msra.mxu0 0.0
    %496 = vmatpush.msra.mxu0 0.0
    %497 = vmatpush.msra.mxu0 0.0
    %498 = vmatpush.msra.mxu0 0.0
    %499 = vmatpush.msra.mxu0 0.0
    %500 = vmatpush.msra.mxu0 0.0
    %501 = vmatpush.msra.mxu0 0.0
    %502 = vmatpush.msra.mxu0 %v443
    %503 = vmatmul.f32.gmra.mxu0 %v485
    %v504 = vpop.f32.mrf.mxu0
    %v505 = vadd.f32 0.0, %v504
    %506 = vdwg.mxu0
    %v507 = vrcp.pop %v483
    %v508 = vmul.f32 %v505, %v507
    %v510 = vsel %vm189, %v508, 0
    %512 = vmatpush.msra.mxu0 0.0
    %513 = vmatpush.msra.mxu0 0.0
    %514 = vmatpush.msra.mxu0 0.0
    %515 = vmatpush.msra.mxu0 0.0
    %516 = vmatpush.msra.mxu0 0.0
    %517 = vmatpush.msra.mxu0 0.0
    %518 = vmatpush.msra.mxu0 0.0
    %519 = vmatpush.msra.mxu0 0.0
    %520 = vmatpush.msra.mxu0 0.0
    %521 = vmatpush.msra.mxu0 0.0
    %522 = vmatpush.msra.mxu0 0.0
    %523 = vmatpush.msra.mxu0 0.0
    %524 = vmatpush.msra.mxu0 0.0
    %525 = vmatpush.msra.mxu0 0.0
    %526 = vmatpush.msra.mxu0 %v378
    %527 = vmatpush.msra.mxu0 %v377
    %528 = vmatmul.f32.gmra.mxu0 %v510
    %v529 = vpop.f32.mrf.mxu0
    %v530 = vadd.f32 0.0, %v529
    %531 = vdwg.mxu0
    %v532 = vadd.f32 %v275, %v530
    %v534 = vsel %vm189, %v400, 0
    %v537 = vsel %vm189, %v423, 0
    %539 = vmatpush.xpose.msra.mxu0 0.0
    %540 = vmatpush.xpose.msra.mxu0 0.0
    %541 = vmatpush.xpose.msra.mxu0 0.0
    %542 = vmatpush.xpose.msra.mxu0 0.0
    %543 = vmatpush.xpose.msra.mxu0 0.0
    %544 = vmatpush.xpose.msra.mxu0 0.0
    %545 = vmatpush.xpose.msra.mxu0 0.0
    %546 = vmatpush.xpose.msra.mxu0 0.0
    %547 = vmatpush.xpose.msra.mxu0 0.0
    %548 = vmatpush.xpose.msra.mxu0 0.0
    %549 = vmatpush.xpose.msra.mxu0 0.0
    %550 = vmatpush.xpose.msra.mxu0 0.0
    %551 = vmatpush.xpose.msra.mxu0 0.0
    %552 = vmatpush.xpose.msra.mxu0 0.0
    %553 = vmatpush.xpose.msra.mxu0 0.0
    %554 = vmatpush.xpose.msra.mxu0 %v537
    %555 = vmatmul.f32.gmra.mxu0 %v534
    %v556 = vpop.f32.mrf.mxu0
    %v557 = vadd.f32 0.0, %v556
    %558 = vdwg.mxu0
    %v559 = vmul.f32 %v557, 0.25
    %v560 = vsel %vm217, %v559, -inf
    %561 = vmax.xlane.f32.xlu0 %v560
    %v562 = vpop.xlane.xlu0 %561
    %v563 = vsub.f32 %v559, %v562
    %v564 = vmul.f32 %v563, 1.442695
    %v565 = vpow.pop %v564
    %v566 = vsel %vm217, %v565, 0.0
    %567 = vadd.xlane.f32.xlu0 %v566
    %v568 = vpop.xlane.xlu0 %567
    %v570 = vsel %vm217, %v565, 0
    %572 = vmatpush.msra.mxu0 0.0
    %573 = vmatpush.msra.mxu0 0.0
    %574 = vmatpush.msra.mxu0 0.0
    %575 = vmatpush.msra.mxu0 0.0
    %576 = vmatpush.msra.mxu0 0.0
    %577 = vmatpush.msra.mxu0 0.0
    %578 = vmatpush.msra.mxu0 0.0
    %579 = vmatpush.msra.mxu0 0.0
    %580 = vmatpush.msra.mxu0 0.0
    %581 = vmatpush.msra.mxu0 0.0
    %582 = vmatpush.msra.mxu0 0.0
    %583 = vmatpush.msra.mxu0 0.0
    %584 = vmatpush.msra.mxu0 0.0
    %585 = vmatpush.msra.mxu0 0.0
    %586 = vmatpush.msra.mxu0 0.0
    %587 = vmatpush.msra.mxu0 %v446
    %588 = vmatmul.f32.gmra.mxu0 %v570
    %v589 = vpop.f32.mrf.mxu0
    %v590 = vadd.f32 0.0, %v589
    %591 = vdwg.mxu0
    %v592 = vrcp.pop %v568
    %v593 = vmul.f32 %v590, %v592
    %v595 = vsel %vm189, %v593, 0
    %597 = vmatpush.msra.mxu0 0.0
    %598 = vmatpush.msra.mxu0 0.0
    %599 = vmatpush.msra.mxu0 0.0
    %600 = vmatpush.msra.mxu0 0.0
    %601 = vmatpush.msra.mxu0 0.0
    %602 = vmatpush.msra.mxu0 0.0
    %603 = vmatpush.msra.mxu0 0.0
    %604 = vmatpush.msra.mxu0 0.0
    %605 = vmatpush.msra.mxu0 0.0
    %606 = vmatpush.msra.mxu0 0.0
    %607 = vmatpush.msra.mxu0 0.0
    %608 = vmatpush.msra.mxu0 0.0
    %609 = vmatpush.msra.mxu0 0.0
    %610 = vmatpush.msra.mxu0 0.0
    %611 = vmatpush.msra.mxu0 %v378
    %612 = vmatpush.msra.mxu0 %v377
    %613 = vmatmul.f32.gmra.mxu0 %v595
    %v614 = vpop.f32.mrf.mxu0
    %v615 = vadd.f32 0.0, %v614
    %616 = vdwg.mxu0
    %v617 = vadd.f32 %v360, %v615
    %s618 = scalar_lea.vmem %s3, 64
    %v619 = vld [vmem:[%s618] sm:$0xff]
    %v620 = vld [vmem:[%s618 + $0x8] sm:$0xff]
    %v621 = vld [vmem:[%s618 + $0x10] sm:$0xff]
    %v622 = vld [vmem:[%s618 + $0x18] sm:$0xff]
    %s623 = scalar_lea.vmem %s3, 192
    %v624 = vld [vmem:[%s623] sm:$0xff]
    %v625 = vld [vmem:[%s623 + $0x8] sm:$0xff]
    %v626 = vld [vmem:[%s623 + $0x10] sm:$0xff]
    %v627 = vld [vmem:[%s623 + $0x18] sm:$0xff]
    %s628 = scalar_lea.vmem %s3, 320
    %v629 = vld [vmem:[%s628] sm:$0xff]
    %v630 = vld [vmem:[%s628 + $0x8] sm:$0xff]
    %v631 = vld [vmem:[%s628 + $0x10] sm:$0xff]
    %v632 = vld [vmem:[%s628 + $0x18] sm:$0xff]
    %s633 = scalar_lea.vmem %s4, 32
    %v634 = vld [vmem:[%s633] sm:$0xff]
    %v635 = vld [vmem:[%s633 + $0x8] sm:$0xff]
    %636 = vmatpush.msra.mxu0 0.0
    %637 = vmatpush.msra.mxu0 0.0
    %638 = vmatpush.msra.mxu0 0.0
    %639 = vmatpush.msra.mxu0 0.0
    %640 = vmatpush.msra.mxu0 0.0
    %641 = vmatpush.msra.mxu0 0.0
    %642 = vmatpush.msra.mxu0 0.0
    %643 = vmatpush.msra.mxu0 0.0
    %644 = vmatpush.msra.mxu0 0.0
    %645 = vmatpush.msra.mxu0 0.0
    %646 = vmatpush.msra.mxu0 0.0
    %647 = vmatpush.msra.mxu0 0.0
    %648 = vmatpush.msra.mxu0 %v622
    %649 = vmatpush.msra.mxu0 %v621
    %650 = vmatpush.msra.mxu0 %v620
    %651 = vmatpush.msra.mxu0 %v619
    %652 = vmatmul.f32.gmra.mxu0 %v115
    %v653 = vpop.f32.mrf.mxu0
    %v654 = vadd.f32 0.0, %v653
    %655 = vmatmul.f32.gmra.mxu0 %v118
    %v656 = vpop.f32.mrf.mxu0
    %v657 = vadd.f32 0.0, %v656
    %658 = vdwg.mxu0
    %659 = vmatpush.msra.mxu0 0.0
    %660 = vmatpush.msra.mxu0 0.0
    %661 = vmatpush.msra.mxu0 0.0
    %662 = vmatpush.msra.mxu0 0.0
    %663 = vmatpush.msra.mxu0 0.0
    %664 = vmatpush.msra.mxu0 0.0
    %665 = vmatpush.msra.mxu0 0.0
    %666 = vmatpush.msra.mxu0 0.0
    %667 = vmatpush.msra.mxu0 0.0
    %668 = vmatpush.msra.mxu0 0.0
    %669 = vmatpush.msra.mxu0 0.0
    %670 = vmatpush.msra.mxu0 0.0
    %671 = vmatpush.msra.mxu0 %v627
    %672 = vmatpush.msra.mxu0 %v626
    %673 = vmatpush.msra.mxu0 %v625
    %674 = vmatpush.msra.mxu0 %v624
    %675 = vmatmul.f32.gmra.mxu0 %v115
    %v676 = vpop.f32.mrf.mxu0
    %v677 = vadd.f32 0.0, %v676
    %678 = vmatmul.f32.gmra.mxu0 %v118
    %v679 = vpop.f32.mrf.mxu0
    %v680 = vadd.f32 0.0, %v679
    %681 = vdwg.mxu0
    %682 = vmatpush.msra.mxu0 0.0
    %683 = vmatpush.msra.mxu0 0.0
    %684 = vmatpush.msra.mxu0 0.0
    %685 = vmatpush.msra.mxu0 0.0
    %686 = vmatpush.msra.mxu0 0.0
    %687 = vmatpush.msra.mxu0 0.0
    %688 = vmatpush.msra.mxu0 0.0
    %689 = vmatpush.msra.mxu0 0.0
    %690 = vmatpush.msra.mxu0 0.0
    %691 = vmatpush.msra.mxu0 0.0
    %692 = vmatpush.msra.mxu0 0.0
    %693 = vmatpush.msra.mxu0 0.0
    %694 = vmatpush.msra.mxu0 %v632
    %695 = vmatpush.msra.mxu0 %v631
    %696 = vmatpush.msra.mxu0 %v630
    %697 = vmatpush.msra.mxu0 %v629
    %698 = vmatmul.f32.gmra.mxu0 %v115
    %v699 = vpop.f32.mrf.mxu0
    %v700 = vadd.f32 0.0, %v699
    %701 = vmatmul.f32.gmra.mxu0 %v118
    %v702 = vpop.f32.mrf.mxu0
    %v703 = vadd.f32 0.0, %v702
    %704 = vdwg.mxu0
    %v706 = vsel %vm189, %v654, 0
    %v709 = vsel %vm189, %v677, 0
    %711 = vmatpush.xpose.msra.mxu0 0.0
    %712 = vmatpush.xpose.msra.mxu0 0.0
    %713 = vmatpush.xpose.msra.mxu0 0.0
    %714 = vmatpush.xpose.msra.mxu0 0.0
    %715 = vmatpush.xpose.msra.mxu0 0.0
    %716 = vmatpush.xpose.msra.mxu0 0.0
    %717 = vmatpush.xpose.msra.mxu0 0.0
    %718 = vmatpush.xpose.msra.mxu0 0.0
    %719 = vmatpush.xpose.msra.mxu0 0.0
    %720 = vmatpush.xpose.msra.mxu0 0.0
    %721 = vmatpush.xpose.msra.mxu0 0.0
    %722 = vmatpush.xpose.msra.mxu0 0.0
    %723 = vmatpush.xpose.msra.mxu0 0.0
    %724 = vmatpush.xpose.msra.mxu0 0.0
    %725 = vmatpush.xpose.msra.mxu0 0.0
    %726 = vmatpush.xpose.msra.mxu0 %v709
    %727 = vmatmul.f32.gmra.mxu0 %v706
    %v728 = vpop.f32.mrf.mxu0
    %v729 = vadd.f32 0.0, %v728
    %730 = vdwg.mxu0
    %v731 = vmul.f32 %v729, 0.25
    %v732 = vsel %vm217, %v731, -inf
    %733 = vmax.xlane.f32.xlu0 %v732
    %v734 = vpop.xlane.xlu0 %733
    %v735 = vsub.f32 %v731, %v734
    %v736 = vmul.f32 %v735, 1.442695
    %v737 = vpow.pop %v736
    %v738 = vsel %vm217, %v737, 0.0
    %739 = vadd.xlane.f32.xlu0 %v738
    %v740 = vpop.xlane.xlu0 %739
    %v742 = vsel %vm217, %v737, 0
    %744 = vmatpush.msra.mxu0 0.0
    %745 = vmatpush.msra.mxu0 0.0
    %746 = vmatpush.msra.mxu0 0.0
    %747 = vmatpush.msra.mxu0 0.0
    %748 = vmatpush.msra.mxu0 0.0
    %749 = vmatpush.msra.mxu0 0.0
    %750 = vmatpush.msra.mxu0 0.0
    %751 = vmatpush.msra.mxu0 0.0
    %752 = vmatpush.msra.mxu0 0.0
    %753 = vmatpush.msra.mxu0 0.0
    %754 = vmatpush.msra.mxu0 0.0
    %755 = vmatpush.msra.mxu0 0.0
    %756 = vmatpush.msra.mxu0 0.0
    %757 = vmatpush.msra.mxu0 0.0
    %758 = vmatpush.msra.mxu0 0.0
    %759 = vmatpush.msra.mxu0 %v700
    %760 = vmatmul.f32.gmra.mxu0 %v742
    %v761 = vpop.f32.mrf.mxu0
    %v762 = vadd.f32 0.0, %v761
    %763 = vdwg.mxu0
    %v764 = vrcp.pop %v740
    %v765 = vmul.f32 %v762, %v764
    %v767 = vsel %vm189, %v765, 0
    %769 = vmatpush.msra.mxu0 0.0
    %770 = vmatpush.msra.mxu0 0.0
    %771 = vmatpush.msra.mxu0 0.0
    %772 = vmatpush.msra.mxu0 0.0
    %773 = vmatpush.msra.mxu0 0.0
    %774 = vmatpush.msra.mxu0 0.0
    %775 = vmatpush.msra.mxu0 0.0
    %776 = vmatpush.msra.mxu0 0.0
    %777 = vmatpush.msra.mxu0 0.0
    %778 = vmatpush.msra.mxu0 0.0
    %779 = vmatpush.msra.mxu0 0.0
    %780 = vmatpush.msra.mxu0 0.0
    %781 = vmatpush.msra.mxu0 0.0
    %782 = vmatpush.msra.mxu0 0.0
    %783 = vmatpush.msra.mxu0 %v635
    %784 = vmatpush.msra.mxu0 %v634
    %785 = vmatmul.f32.gmra.mxu0 %v767
    %v786 = vpop.f32.mrf.mxu0
    %v787 = vadd.f32 0.0, %v786
    %788 = vdwg.mxu0
    %v789 = vadd.f32 %v532, %v787
    %v791 = vsel %vm189, %v657, 0
    %v794 = vsel %vm189, %v680, 0
    %796 = vmatpush.xpose.msra.mxu0 0.0
    %797 = vmatpush.xpose.msra.mxu0 0.0
    %798 = vmatpush.xpose.msra.mxu0 0.0
    %799 = vmatpush.xpose.msra.mxu0 0.0
    %800 = vmatpush.xpose.msra.mxu0 0.0
    %801 = vmatpush.xpose.msra.mxu0 0.0
    %802 = vmatpush.xpose.msra.mxu0 0.0
    %803 = vmatpush.xpose.msra.mxu0 0.0
    %804 = vmatpush.xpose.msra.mxu0 0.0
    %805 = vmatpush.xpose.msra.mxu0 0.0
    %806 = vmatpush.xpose.msra.mxu0 0.0
    %807 = vmatpush.xpose.msra.mxu0 0.0
    %808 = vmatpush.xpose.msra.mxu0 0.0
    %809 = vmatpush.xpose.msra.mxu0 0.0
    %810 = vmatpush.xpose.msra.mxu0 0.0
    %811 = vmatpush.xpose.msra.mxu0 %v794
    %812 = vmatmul.f32.gmra.mxu0 %v791
    %v813 = vpop.f32.mrf.mxu0
    %v814 = vadd.f32 0.0, %v813
    %815 = vdwg.mxu0
    %v816 = vmul.f32 %v814, 0.25
    %v817 = vsel %vm217, %v816, -inf
    %818 = vmax.xlane.f32.xlu0 %v817
    %v819 = vpop.xlane.xlu0 %818
    %v820 = vsub.f32 %v816, %v819
    %v821 = vmul.f32 %v820, 1.442695
    %v822 = vpow.pop %v821
    %v823 = vsel %vm217, %v822, 0.0
    %824 = vadd.xlane.f32.xlu0 %v823
    %v825 = vpop.xlane.xlu0 %824
    %v827 = vsel %vm217, %v822, 0
    %829 = vmatpush.msra.mxu0 0.0
    %830 = vmatpush.msra.mxu0 0.0
    %831 = vmatpush.msra.mxu0 0.0
    %832 = vmatpush.msra.mxu0 0.0
    %833 = vmatpush.msra.mxu0 0.0
    %834 = vmatpush.msra.mxu0 0.0
    %835 = vmatpush.msra.mxu0 0.0
    %836 = vmatpush.msra.mxu0 0.0
    %837 = vmatpush.msra.mxu0 0.0
    %838 = vmatpush.msra.mxu0 0.0
    %839 = vmatpush.msra.mxu0 0.0
    %840 = vmatpush.msra.mxu0 0.0
    %841 = vmatpush.msra.mxu0 0.0
    %842 = vmatpush.msra.mxu0 0.0
    %843 = vmatpush.msra.mxu0 0.0
    %844 = vmatpush.msra.mxu0 %v703
    %845 = vmatmul.f32.gmra.mxu0 %v827
    %v846 = vpop.f32.mrf.mxu0
    %v847 = vadd.f32 0.0, %v846
    %848 = vdwg.mxu0
    %v849 = vrcp.pop %v825
    %v850 = vmul.f32 %v847, %v849
    %v852 = vsel %vm189, %v850, 0
    %854 = vmatpush.msra.mxu0 0.0
    %855 = vmatpush.msra.mxu0 0.0
    %856 = vmatpush.msra.mxu0 0.0
    %857 = vmatpush.msra.mxu0 0.0
    %858 = vmatpush.msra.mxu0 0.0
    %859 = vmatpush.msra.mxu0 0.0
    %860 = vmatpush.msra.mxu0 0.0
    %861 = vmatpush.msra.mxu0 0.0
    %862 = vmatpush.msra.mxu0 0.0
    %863 = vmatpush.msra.mxu0 0.0
    %864 = vmatpush.msra.mxu0 0.0
    %865 = vmatpush.msra.mxu0 0.0
    %866 = vmatpush.msra.mxu0 0.0
    %867 = vmatpush.msra.mxu0 0.0
    %868 = vmatpush.msra.mxu0 %v635
    %869 = vmatpush.msra.mxu0 %v634
    %870 = vmatmul.f32.gmra.mxu0 %v852
    %v871 = vpop.f32.mrf.mxu0
    %v872 = vadd.f32 0.0, %v871
    %873 = vdwg.mxu0
    %v874 = vadd.f32 %v617, %v872
    %s875 = scalar_lea.vmem %s3, 96
    %v876 = vld [vmem:[%s875] sm:$0xff]
    %v877 = vld [vmem:[%s875 + $0x8] sm:$0xff]
    %v878 = vld [vmem:[%s875 + $0x10] sm:$0xff]
    %v879 = vld [vmem:[%s875 + $0x18] sm:$0xff]
    %s880 = scalar_lea.vmem %s3, 224
    %v881 = vld [vmem:[%s880] sm:$0xff]
    %v882 = vld [vmem:[%s880 + $0x8] sm:$0xff]
    %v883 = vld [vmem:[%s880 + $0x10] sm:$0xff]
    %v884 = vld [vmem:[%s880 + $0x18] sm:$0xff]
    %s885 = scalar_lea.vmem %s3, 352
    %v886 = vld [vmem:[%s885] sm:$0xff]
    %v887 = vld [vmem:[%s885 + $0x8] sm:$0xff]
    %v888 = vld [vmem:[%s885 + $0x10] sm:$0xff]
    %v889 = vld [vmem:[%s885 + $0x18] sm:$0xff]
    %s890 = scalar_lea.vmem %s4, 48
    %v891 = vld [vmem:[%s890] sm:$0xff]
    %v892 = vld [vmem:[%s890 + $0x8] sm:$0xff]
    %893 = vmatpush.msra.mxu0 0.0
    %894 = vmatpush.msra.mxu0 0.0
    %895 = vmatpush.msra.mxu0 0.0
    %896 = vmatpush.msra.mxu0 0.0
    %897 = vmatpush.msra.mxu0 0.0
    %898 = vmatpush.msra.mxu0 0.0
    %899 = vmatpush.msra.mxu0 0.0
    %900 = vmatpush.msra.mxu0 0.0
    %901 = vmatpush.msra.mxu0 0.0
    %902 = vmatpush.msra.mxu0 0.0
    %903 = vmatpush.msra.mxu0 0.0
    %904 = vmatpush.msra.mxu0 0.0
    %905 = vmatpush.msra.mxu0 %v879
    %906 = vmatpush.msra.mxu0 %v878
    %907 = vmatpush.msra.mxu0 %v877
    %908 = vmatpush.msra.mxu0 %v876
    %909 = vmatmul.f32.gmra.mxu0 %v115
    %v910 = vpop.f32.mrf.mxu0
    %v911 = vadd.f32 0.0, %v910
    %912 = vmatmul.f32.gmra.mxu0 %v118
    %v913 = vpop.f32.mrf.mxu0
    %v914 = vadd.f32 0.0, %v913
    %915 = vdwg.mxu0
    %916 = vmatpush.msra.mxu0 0.0
    %917 = vmatpush.msra.mxu0 0.0
    %918 = vmatpush.msra.mxu0 0.0
    %919 = vmatpush.msra.mxu0 0.0
    %920 = vmatpush.msra.mxu0 0.0
    %921 = vmatpush.msra.mxu0 0.0
    %922 = vmatpush.msra.mxu0 0.0
    %923 = vmatpush.msra.mxu0 0.0
    %924 = vmatpush.msra.mxu0 0.0
    %925 = vmatpush.msra.mxu0 0.0
    %926 = vmatpush.msra.mxu0 0.0
    %927 = vmatpush.msra.mxu0 0.0
    %928 = vmatpush.msra.mxu0 %v884
    %929 = vmatpush.msra.mxu0 %v883
    %930 = vmatpush.msra.mxu0 %v882
    %931 = vmatpush.msra.mxu0 %v881
    %932 = vmatmul.f32.gmra.mxu0 %v115
    %v933 = vpop.f32.mrf.mxu0
    %v934 = vadd.f32 0.0, %v933
    %935 = vmatmul.f32.gmra.mxu0 %v118
    %v936 = vpop.f32.mrf.mxu0
    %v937 = vadd.f32 0.0, %v936
    %938 = vdwg.mxu0
    %939 = vmatpush.msra.mxu0 0.0
    %940 = vmatpush.msra.mxu0 0.0
    %941 = vmatpush.msra.mxu0 0.0
    %942 = vmatpush.msra.mxu0 0.0
    %943 = vmatpush.msra.mxu0 0.0
    %944 = vmatpush.msra.mxu0 0.0
    %945 = vmatpush.msra.mxu0 0.0
    %946 = vmatpush.msra.mxu0 0.0
    %947 = vmatpush.msra.mxu0 0.0
    %948 = vmatpush.msra.mxu0 0.0
    %949 = vmatpush.msra.mxu0 0.0
    %950 = vmatpush.msra.mxu0 0.0
    %951 = vmatpush.msra.mxu0 %v889
    %952 = vmatpush.msra.mxu0 %v888
    %953 = vmatpush.msra.mxu0 %v887
    %954 = vmatpush.msra.mxu0 %v886
    %955 = vmatmul.f32.gmra.mxu0 %v115
    %v956 = vpop.f32.mrf.mxu0
    %v957 = vadd.f32 0.0, %v956
    %958 = vmatmul.f32.gmra.mxu0 %v118
    %v959 = vpop.f32.mrf.mxu0
    %v960 = vadd.f32 0.0, %v959
    %961 = vdwg.mxu0
    %v963 = vsel %vm189, %v911, 0
    %v966 = vsel %vm189, %v934, 0
    %968 = vmatpush.xpose.msra.mxu0 0.0
    %969 = vmatpush.xpose.msra.mxu0 0.0
    %970 = vmatpush.xpose.msra.mxu0 0.0
    %971 = vmatpush.xpose.msra.mxu0 0.0
    %972 = vmatpush.xpose.msra.mxu0 0.0
    %973 = vmatpush.xpose.msra.mxu0 0.0
    %974 = vmatpush.xpose.msra.mxu0 0.0
    %975 = vmatpush.xpose.msra.mxu0 0.0
    %976 = vmatpush.xpose.msra.mxu0 0.0
    %977 = vmatpush.xpose.msra.mxu0 0.0
    %978 = vmatpush.xpose.msra.mxu0 0.0
    %979 = vmatpush.xpose.msra.mxu0 0.0
    %980 = vmatpush.xpose.msra.mxu0 0.0
    %981 = vmatpush.xpose.msra.mxu0 0.0
    %982 = vmatpush.xpose.msra.mxu0 0.0
    %983 = vmatpush.xpose.msra.mxu0 %v966
    %984 = vmatmul.f32.gmra.mxu0 %v963
    %v985 = vpop.f32.mrf.mxu0
    %v986 = vadd.f32 0.0, %v985
    %987 = vdwg.mxu0
    %v988 = vmul.f32 %v986, 0.25
    %v989 = vsel %vm217, %v988, -inf
    %990 = vmax.xlane.f32.xlu0 %v989
    %v991 = vpop.xlane.xlu0 %990
    %v992 = vsub.f32 %v988, %v991
    %v993 = vmul.f32 %v992, 1.442695
    %v994 = vpow.pop %v993
    %v995 = vsel %vm217, %v994, 0.0
    %996 = vadd.xlane.f32.xlu0 %v995
    %v997 = vpop.xlane.xlu0 %996
    %v999 = vsel %vm217, %v994, 0
    %1001 = vmatpush.msra.mxu0 0.0
    %1002 = vmatpush.msra.mxu0 0.0
    %1003 = vmatpush.msra.mxu0 0.0
    %1004 = vmatpush.msra.mxu0 0.0
    %1005 = vmatpush.msra.mxu0 0.0
    %1006 = vmatpush.msra.mxu0 0.0
    %1007 = vmatpush.msra.mxu0 0.0
    %1008 = vmatpush.msra.mxu0 0.0
    %1009 = vmatpush.msra.mxu0 0.0
    %1010 = vmatpush.msra.mxu0 0.0
    %1011 = vmatpush.msra.mxu0 0.0
    %1012 = vmatpush.msra.mxu0 0.0
    %1013 = vmatpush.msra.mxu0 0.0
    %1014 = vmatpush.msra.mxu0 0.0
    %1015 = vmatpush.msra.mxu0 0.0
    %1016 = vmatpush.msra.mxu0 %v957
    %1017 = vmatmul.f32.gmra.mxu0 %v999
    %v1018 = vpop.f32.mrf.mxu0
    %v1019 = vadd.f32 0.0, %v1018
    %1020 = vdwg.mxu0
    %v1021 = vrcp.pop %v997
    %v1022 = vmul.f32 %v1019, %v1021
    %v1024 = vsel %vm189, %v1022, 0
    %1026 = vmatpush.msra.mxu0 0.0
    %1027 = vmatpush.msra.mxu0 0.0
    %1028 = vmatpush.msra.mxu0 0.0
    %1029 = vmatpush.msra.mxu0 0.0
    %1030 = vmatpush.msra.mxu0 0.0
    %1031 = vmatpush.msra.mxu0 0.0
    %1032 = vmatpush.msra.mxu0 0.0
    %1033 = vmatpush.msra.mxu0 0.0
    %1034 = vmatpush.msra.mxu0 0.0
    %1035 = vmatpush.msra.mxu0 0.0
    %1036 = vmatpush.msra.mxu0 0.0
    %1037 = vmatpush.msra.mxu0 0.0
    %1038 = vmatpush.msra.mxu0 0.0
    %1039 = vmatpush.msra.mxu0 0.0
    %1040 = vmatpush.msra.mxu0 %v892
    %1041 = vmatpush.msra.mxu0 %v891
    %1042 = vmatmul.f32.gmra.mxu0 %v1024
    %v1043 = vpop.f32.mrf.mxu0
    %v1044 = vadd.f32 0.0, %v1043
    %1045 = vdwg.mxu0
    %v1046 = vadd.f32 %v789, %v1044
    %v1048 = vsel %vm189, %v914, 0
    %v1051 = vsel %vm189, %v937, 0
    %1053 = vmatpush.xpose.msra.mxu0 0.0
    %1054 = vmatpush.xpose.msra.mxu0 0.0
    %1055 = vmatpush.xpose.msra.mxu0 0.0
    %1056 = vmatpush.xpose.msra.mxu0 0.0
    %1057 = vmatpush.xpose.msra.mxu0 0.0
    %1058 = vmatpush.xpose.msra.mxu0 0.0
    %1059 = vmatpush.xpose.msra.mxu0 0.0
    %1060 = vmatpush.xpose.msra.mxu0 0.0
    %1061 = vmatpush.xpose.msra.mxu0 0.0
    %1062 = vmatpush.xpose.msra.mxu0 0.0
    %1063 = vmatpush.xpose.msra.mxu0 0.0
    %1064 = vmatpush.xpose.msra.mxu0 0.0
    %1065 = vmatpush.xpose.msra.mxu0 0.0
    %1066 = vmatpush.xpose.msra.mxu0 0.0
    %1067 = vmatpush.xpose.msra.mxu0 0.0
    %1068 = vmatpush.xpose.msra.mxu0 %v1051
    %1069 = vmatmul.f32.gmra.mxu0 %v1048
    %v1070 = vpop.f32.mrf.mxu0
    %v1071 = vadd.f32 0.0, %v1070
    %1072 = vdwg.mxu0
    %v1073 = vmul.f32 %v1071, 0.25
    %v1074 = vsel %vm217, %v1073, -inf
    %1075 = vmax.xlane.f32.xlu0 %v1074
    %v1076 = vpop.xlane.xlu0 %1075
    %v1077 = vsub.f32 %v1073, %v1076
    %v1078 = vmul.f32 %v1077, 1.442695
    %v1079 = vpow.pop %v1078
    %v1080 = vsel %vm217, %v1079, 0.0
    %1081 = vadd.xlane.f32.xlu0 %v1080
    %v1082 = vpop.xlane.xlu0 %1081
    %v1084 = vsel %vm217, %v1079, 0
    %1086 = vmatpush.msra.mxu0 0.0
    %1087 = vmatpush.msra.mxu0 0.0
    %1088 = vmatpush.msra.mxu0 0.0
    %1089 = vmatpush.msra.mxu0 0.0
    %1090 = vmatpush.msra.mxu0 0.0
    %1091 = vmatpush.msra.mxu0 0.0
    %1092 = vmatpush.msra.mxu0 0.0
    %1093 = vmatpush.msra.mxu0 0.0
    %1094 = vmatpush.msra.mxu0 0.0
    %1095 = vmatpush.msra.mxu0 0.0
    %1096 = vmatpush.msra.mxu0 0.0
    %1097 = vmatpush.msra.mxu0 0.0
    %1098 = vmatpush.msra.mxu0 0.0
    %1099 = vmatpush.msra.mxu0 0.0
    %1100 = vmatpush.msra.mxu0 0.0
    %1101 = vmatpush.msra.mxu0 %v960
    %1102 = vmatmul.f32.gmra.mxu0 %v1084
    %v1103 = vpop.f32.mrf.mxu0
    %v1104 = vadd.f32 0.0, %v1103
    %1105 = vdwg.mxu0
    %v1106 = vrcp.pop %v1082
    %v1107 = vmul.f32 %v1104, %v1106
    %v1109 = vsel %vm189, %v1107, 0
    %1111 = vmatpush.msra.mxu0 0.0
    %1112 = vmatpush.msra.mxu0 0.0
    %1113 = vmatpush.msra.mxu0 0.0
    %1114 = vmatpush.msra.mxu0 0.0
    %1115 = vmatpush.msra.mxu0 0.0
    %1116 = vmatpush.msra.mxu0 0.0
    %1117 = vmatpush.msra.mxu0 0.0
    %1118 = vmatpush.msra.mxu0 0.0
    %1119 = vmatpush.msra.mxu0 0.0
    %1120 = vmatpush.msra.mxu0 0.0
    %1121 = vmatpush.msra.mxu0 0.0
    %1122 = vmatpush.msra.mxu0 0.0
    %1123 = vmatpush.msra.mxu0 0.0
    %1124 = vmatpush.msra.mxu0 0.0
    %1125 = vmatpush.msra.mxu0 %v892
    %1126 = vmatpush.msra.mxu0 %v891
    %1127 = vmatmul.f32.gmra.mxu0 %v1109
    %v1128 = vpop.f32.mrf.mxu0
    %v1129 = vadd.f32 0.0, %v1128
    %1130 = vdwg.mxu0
    %v1131 = vadd.f32 %v874, %v1129
    %1132 = vst.msk [vmem:[#allocation2] sm:$0xff] %vm29, %v1046
    %1133 = vst.msk [vmem:[#allocation2 + $0x8] sm:$0xff] %vm29, %v1131
    // Predicated region
    $region26: #{tpu_custom_call.1} parent=1 // pred_check
      _
    $region27: #{tpu_custom_call.1} parent=1 // pred_check_branch
      %1135 = sbr.rel (0) target = $region29
    $region28: #{tpu_custom_call.1} parent=1 // pred_region
      %1137 = vsyncadd [#allocation3], 0
      %s1138 = sshll.u32 [#allocation2], 4
      %s1139 = int_to_ptr.vmem [resolvable:$true] %s1138
      %s1140 = sshll.u32 %s6, 4
      %s1141 = int_to_ptr.hbm [resolvable:$true] %s1140
      %1146 = dma.vmem_to_hbm [thread:$0]  %s1139, 256, %s1141, [#allocation3], 128, 128, 8
    $region29: #{tpu_custom_call.1} parent=1 // pred_fallthru
      _
    // Predicated region
    $region30: #{tpu_custom_call.1} parent=1 // pred_check
      _
    $region31: #{tpu_custom_call.1} parent=1 // pred_check_branch
      %1148 = sbr.rel (0) target = $region33
    $region32: #{tpu_custom_call.1} parent=1 // pred_region
      %1150 = dma.done [#allocation3], 256
    $region33: #{tpu_custom_call.1} parent=1 // pred_fallthru
      _
    %1151 = vsyncpa [#allocation3], 1

</llo_original>
